<compile_context>
chip_gen: v7x
topology: tpu7x:2x2x1
jax: 0.10.0
libtpu: 0.0.40
codegen_flags: <defaults>
</compile_context>

<pallas_src>
import functools

import jax
import jax.numpy as jnp
from jax.experimental import pallas as pl
from jax.experimental.pallas import tpu as pltpu

LN_EPS = 1e-5  # PyTorch nn.LayerNorm default


def build_3d_grid_flat(resolution):
    """build_3d_grid(...) flattened to (N, 6)."""
    ranges = [jnp.linspace(0.0, 1.0, r) for r in resolution]
    g = jnp.stack(jnp.meshgrid(*ranges, indexing="ij"), axis=-1)  # (nf,h,w,3)
    g = jnp.concatenate([g, 1.0 - g], axis=-1)                    # (nf,h,w,6)
    return g.reshape(-1, 6).astype(jnp.float32)


def _layernorm(x, gb):
    """LayerNorm; gb is the stacked [gamma, beta] pair of shape (2, D)."""
    mu = jnp.mean(x, axis=-1, keepdims=True)
    var = jnp.mean((x - mu) ** 2, axis=-1, keepdims=True)
    return (x - mu) * jax.lax.rsqrt(var + LN_EPS) * gb[0] + gb[1]


def _slot_attention_kernel(batch, n_tok, num_out, scale, eps,
                           x_ref, pe_ref, slots_ref,
                           wsq_ref, bsq_ref, wkv_ref, bkv_ref, ln_ref,
                           out_slots_ref, out_attn_ref):
    # Weight layout (read per-use, never materialized as full stacks):
    #   wsq[0]=FC1  wsq[1]=FC2  wsq[2]=to_q  wsq[3]=fc1  wsq[4]=fc2
    #   wkv = [to_k | to_v] fused -> (D, 2D)
    #   ln[0]=LN  ln[1]=norm_input  ln[2]=norm_slots  ln[3]=norm_pre_ff
    dim = x_ref.shape[-1]

    # ---- token branch on the fused (B*N, D) slab -------------------------
    x = x_ref[...] + pe_ref[...]                                   # soft PE add
    x = _layernorm(x, ln_ref[0])                                   # self.LN
    x = jnp.maximum(
        jnp.dot(x, wsq_ref[0], preferred_element_type=jnp.float32)
        + bsq_ref[0], 0.0)                                         # FC1 + relu
    x = jnp.dot(x, wsq_ref[1],
                preferred_element_type=jnp.float32) + bsq_ref[1]   # FC2
    x = _layernorm(x, ln_ref[1])                                   # norm_input

    kv = jnp.dot(x, wkv_ref[...],
                 preferred_element_type=jnp.float32) + bkv_ref[...]  # (B*N,2D)
    k = kv[:, :dim]
    v = kv[:, dim:]

    # ---- slot branch (slots buffer is identical for every batch) ---------
    s = _layernorm(slots_ref[...], ln_ref[2])                      # norm_slots
    q = jnp.dot(s, wsq_ref[2],
                preferred_element_type=jnp.float32) + bsq_ref[2]   # (S, D)

    # dots for all batches at once, last-axis contraction (no k transpose).
    dots = jax.lax.dot_general(
        q, k, (((1,), (1,)), ((), ())),
        preferred_element_type=jnp.float32) * scale                # (S, B*N)

    # torch softmax(dim=1) == softmax over the SLOT axis; every column of the
    # (S, B*N) slab is independent, so the batch fusion is transparent here.
    m = jnp.max(dots, axis=0, keepdims=True)
    e = jnp.exp(dots - m)
    attn_ori = e / jnp.sum(e, axis=0, keepdims=True) + eps         # (S, B*N)
    out_attn_ref[...] = attn_ori          # lane-dense (8, 128) unmasked store

    # ---- per-batch: renormalize over N tokens and aggregate v ------------
    rows = []
    for bb in range(batch):
        a_b = attn_ori[:, bb * n_tok:(bb + 1) * n_tok]             # (S, N)
        inv = pl.reciprocal(jnp.sum(a_b, axis=-1, keepdims=True),
                            approx=True)                           # EUP slot
        upd = jnp.dot(a_b * inv, v[bb * n_tok:(bb + 1) * n_tok, :],
                      preferred_element_type=jnp.float32)          # (S, D)
        rows.append(upd[:num_out, :])        # allocated_slot slice (static)
    new_slots = jnp.concatenate(rows, axis=0)                      # (B*no, D)

    # ---- slot feed-forward on the fused (B*num_out, D) slab --------------
    pre = _layernorm(new_slots, ln_ref[3])                         # norm_pre_ff
    h = jnp.maximum(
        jnp.dot(pre, wsq_ref[3], preferred_element_type=jnp.float32)
        + bsq_ref[3], 0.0)                                         # fc1 + relu
    h = jnp.dot(h, wsq_ref[4],
                preferred_element_type=jnp.float32) + bsq_ref[4]   # fc2
    out_slots_ref[...] = new_slots + h


def slot_attention_forward(inputs, params, *, num_slots, num_actor_class,
                           eps=1e-8):
    b, nf, h, w, d = inputs.shape
    n = nf * h * w
    num_out = min(num_actor_class, num_slots)     # python slice semantics
    scale = float(d) ** -0.5

    x = inputs.reshape(b * n, d)

    # Hoisted out of the kernel: batch-independent PE matmul (K=6 contraction).
    pe = params["grid"] @ params["emb_w"] + params["emb_b"]        # (N, D)
    pe_full = jnp.broadcast_to(pe[None], (b, n, d)).reshape(b * n, d)

    # Pack weights: square projections stacked; to_k/to_v fused into (D, 2D).
    W, B_ = params["w"], params["b"]
    w_sq = jnp.stack([W[0], W[1], W[2], W[5], W[6]])               # (5, D, D)
    b_sq = jnp.stack([B_[0], B_[1], B_[2], B_[5], B_[6]])          # (5, D)
    w_kv = jnp.concatenate([W[3], W[4]], axis=1)                   # (D, 2D)
    b_kv = jnp.concatenate([B_[3], B_[4]])[None, :]                # (1, 2D)

    kernel = functools.partial(_slot_attention_kernel, b, n, num_out, scale,
                               eps)

    out_shape = (jax.ShapeDtypeStruct((b * num_out, d), jnp.float32),
                 jax.ShapeDtypeStruct((num_slots, b * n), jnp.float32))

    in_specs = [
        pl.BlockSpec((b * n, d), lambda i: (0, 0)),          # fused inputs
        pl.BlockSpec((b * n, d), lambda i: (0, 0)),          # PE (pre-tiled)
        pl.BlockSpec((num_slots, d), lambda i: (0, 0)),      # slots buffer
        pl.BlockSpec((5, d, d), lambda i: (0, 0, 0)),        # square weights
        pl.BlockSpec((5, d), lambda i: (0, 0)),              # square biases
        pl.BlockSpec((d, 2 * d), lambda i: (0, 0)),          # fused k/v weight
        pl.BlockSpec((1, 2 * d), lambda i: (0, 0)),          # fused k/v bias
        pl.BlockSpec((4, 2, d), lambda i: (0, 0, 0)),        # LN gamma/beta
    ]
    out_specs = (pl.BlockSpec((b * num_out, d), lambda i: (0, 0)),
                 pl.BlockSpec((num_slots, b * n), lambda i: (0, 0)))

    f = pl.pallas_call(
        kernel,
        out_shape=out_shape,
        grid_spec=pltpu.PrefetchScalarGridSpec(
            num_scalar_prefetch=0,
            grid=(1,),
            in_specs=in_specs,
            out_specs=out_specs),
        compiler_params=pltpu.CompilerParams(
            dimension_semantics=("arbitrary",)),
    )
    slots_flat, attn_flat = f(x, pe_full, params["slots"],
                              w_sq, b_sq, w_kv, b_kv, params["ln"])

    slots_out = slots_flat.reshape(b, num_out, d)
    attns = attn_flat.reshape(num_slots, b, n).transpose(1, 0, 2)
    return slots_out, attns


def reference_forward(inputs, params, *, num_slots, num_actor_class, eps=1e-8):
    """Pure-JAX replica of the PyTorch forward for verification."""
    b, nf, h, w, d = inputs.shape
    n = nf * h * w
    x = inputs.reshape(b, n, d)
    pe = params["grid"] @ params["emb_w"] + params["emb_b"]
    x = x + pe[None]
    W, B, ln = params["w"], params["b"], params["ln"]

    def lnorm(t, i):
        mu = t.mean(-1, keepdims=True)
        var = ((t - mu) ** 2).mean(-1, keepdims=True)
        return (t - mu) / jnp.sqrt(var + LN_EPS) * ln[i, 0] + ln[i, 1]

    x = lnorm(x, 0)
    x = jax.nn.relu(x @ W[0] + B[0])
    x = x @ W[1] + B[1]
    x = lnorm(x, 1)
    k = x @ W[3] + B[3]
    v = x @ W[4] + B[4]
    s = jnp.broadcast_to(params["slots"], (b, num_slots, d))
    s = lnorm(s, 2)
    q = s @ W[2] + B[2]
    dots = jnp.einsum("bid,bjd->bij", q, k) * (float(d) ** -0.5)
    attn_ori = jax.nn.softmax(dots, axis=1) + eps
    attn = attn_ori / attn_ori.sum(-1, keepdims=True)
    slots = jnp.einsum("bjd,bij->bid", v, attn)
    slots = slots[:, :num_actor_class, :]
    pre = lnorm(slots, 3)
    hid = jax.nn.relu(pre @ W[5] + B[5]) @ W[6] + B[6]
    return slots + hid, attn_ori


def make_params(key, dim, num_slots, resolution):
    ks = jax.random.split(key, 6)
    params = {
        "grid": build_3d_grid_flat(resolution),                          # (N, 6)
        "emb_w": 0.1 * jax.random.normal(ks[0], (6, dim), jnp.float32),
        "emb_b": 0.05 * jax.random.normal(ks[1], (1, dim), jnp.float32),
        # slots buffer ~ normal(mu, |sigma|) sampled once at init
        "slots": jax.random.normal(ks[2], (num_slots, dim), jnp.float32),
        # FC1, FC2, to_q, to_k, to_v, fc1, fc2
        "w": 0.1 * jax.random.normal(ks[3], (7, dim, dim), jnp.float32),
        "b": 0.05 * jax.random.normal(ks[4], (7, dim), jnp.float32),
        # LN, norm_input, norm_slots, norm_pre_ff : [gamma, beta]
        "ln": jnp.stack([
            jnp.stack([jnp.ones((dim,), jnp.float32),
                       jnp.zeros((dim,), jnp.float32)])
            for _ in range(4)
        ]),
    }
    return params


if __name__ == "__main__":
    # Small shapes consistent with the module's forward
    B = 2
    DIM = 32
    RESOLUTION = [4, 4, 4]            # (nf, h, w) -> N = 64 tokens
    NUM_SLOTS = 8
    NUM_ACTOR_CLASS = 4               # allocated_slot=True slice
    EPS = 1e-8

    key = jax.random.PRNGKey(0)
    k_in, k_par = jax.random.split(key)
    inputs = jax.random.normal(
        k_in, (B, RESOLUTION[0], RESOLUTION[1], RESOLUTION[2], DIM),
        jnp.float32)
    params = make_params(k_par, DIM, NUM_SLOTS, RESOLUTION)

    slots_out, attns = slot_attention_forward(
        inputs, params, num_slots=NUM_SLOTS,
        num_actor_class=NUM_ACTOR_CLASS, eps=EPS)
    jax.block_until_ready((slots_out, attns))

    ref_slots, ref_attns = reference_forward(
        inputs, params, num_slots=NUM_SLOTS,
        num_actor_class=NUM_ACTOR_CLASS, eps=EPS)

    assert slots_out.shape == (B, NUM_ACTOR_CLASS, DIM)
    assert attns.shape == (B, NUM_SLOTS,
                           RESOLUTION[0] * RESOLUTION[1] * RESOLUTION[2])
    # attn output does not go through the approximate reciprocal -> tight tol;
    # slots output does (pl.reciprocal(approx=True)) -> slightly looser tol.
    assert jnp.allclose(attns, ref_attns, atol=2e-5, rtol=1e-4)
    assert jnp.allclose(slots_out, ref_slots, atol=5e-3, rtol=5e-3)

    print("KERNEL_OK")
</pallas_src>

<mosaic_0001>
module attributes {stable_mosaic.version = 11 : i64} {
  func.func @_slot_attention_kernel(%arg0: i32, %arg1: memref<128x32xf32, #tpu.memory_space<vmem>>, %arg2: memref<128x32xf32, #tpu.memory_space<vmem>>, %arg3: memref<8x32xf32, #tpu.memory_space<vmem>>, %arg4: memref<5x32x32xf32, #tpu.memory_space<vmem>>, %arg5: memref<5x32xf32, #tpu.memory_space<vmem>>, %arg6: memref<32x64xf32, #tpu.memory_space<vmem>>, %arg7: memref<1x64xf32, #tpu.memory_space<vmem>>, %arg8: memref<4x2x32xf32, #tpu.memory_space<vmem>>, %arg9: memref<8x32xf32, #tpu.memory_space<vmem>>, %arg10: memref<8x128xf32, #tpu.memory_space<vmem>>) attributes {dimension_semantics = [#tpu.dimension_semantics<arbitrary>], iteration_bounds = array<i64: 1>, scalar_prefetch = 0 : i64, scratch_operands = 0 : i64, tpu.core_type = #tpu.core_type<tc>, window_params = [{pipeline_mode = #tpu.pipeline_mode<synchronous>, transform_indices = @transform_0, window_bounds = array<i64: 128, 32>}, {pipeline_mode = #tpu.pipeline_mode<synchronous>, transform_indices = @transform_1, window_bounds = array<i64: 128, 32>}, {pipeline_mode = #tpu.pipeline_mode<synchronous>, transform_indices = @transform_2, window_bounds = array<i64: 8, 32>}, {pipeline_mode = #tpu.pipeline_mode<synchronous>, transform_indices = @transform_3, window_bounds = array<i64: 5, 32, 32>}, {pipeline_mode = #tpu.pipeline_mode<synchronous>, transform_indices = @transform_4, window_bounds = array<i64: 5, 32>}, {pipeline_mode = #tpu.pipeline_mode<synchronous>, transform_indices = @transform_5, window_bounds = array<i64: 32, 64>}, {pipeline_mode = #tpu.pipeline_mode<synchronous>, transform_indices = @transform_6, window_bounds = array<i64: 1, 64>}, {pipeline_mode = #tpu.pipeline_mode<synchronous>, transform_indices = @transform_7, window_bounds = array<i64: 4, 2, 32>}, {pipeline_mode = #tpu.pipeline_mode<synchronous>, transform_indices = @transform_8, window_bounds = array<i64: 8, 32>}, {pipeline_mode = #tpu.pipeline_mode<synchronous>, transform_indices = @transform_9, window_bounds = array<i64: 8, 128>}]} {
    %c0 = arith.constant 0 : index
    %c0_0 = arith.constant 0 : index
    %0 = vector.load %arg1[%c0, %c0_0] : memref<128x32xf32, #tpu.memory_space<vmem>>, vector<128x32xf32>
    %c0_1 = arith.constant 0 : index
    %c0_2 = arith.constant 0 : index
    %1 = vector.load %arg2[%c0_1, %c0_2] : memref<128x32xf32, #tpu.memory_space<vmem>>, vector<128x32xf32>
    %2 = arith.addf %0, %1 : vector<128x32xf32>
    %c0_3 = arith.constant 0 : index
    %c0_4 = arith.constant 0 : index
    %c0_5 = arith.constant 0 : index
    %3 = vector.load %arg8[%c0_3, %c0_4, %c0_5] : memref<4x2x32xf32, #tpu.memory_space<vmem>>, vector<1x2x32xf32>
    %4 = vector.shape_cast %3 : vector<1x2x32xf32> to vector<2x32xf32>
    %cst = arith.constant dense<0.000000e+00> : vector<128xf32>
    %5 = vector.multi_reduction <add>, %2, %cst [1] : vector<128x32xf32> to vector<128xf32>
    %6 = vector.shape_cast %5 : vector<128xf32> to vector<128x1xf32>
    %cst_6 = arith.constant 3.200000e+01 : f32
    %7 = vector.broadcast %cst_6 : f32 to vector<128x1xf32>
    %8 = arith.divf %6, %7 : vector<128x1xf32>
    %9 = vector.broadcast %8 : vector<128x1xf32> to vector<128x32xf32>
    %10 = arith.subf %2, %9 : vector<128x32xf32>
    %11 = arith.mulf %10, %10 : vector<128x32xf32>
    %cst_7 = arith.constant dense<0.000000e+00> : vector<128xf32>
    %12 = vector.multi_reduction <add>, %11, %cst_7 [1] : vector<128x32xf32> to vector<128xf32>
    %13 = vector.shape_cast %12 : vector<128xf32> to vector<128x1xf32>
    %cst_8 = arith.constant 3.200000e+01 : f32
    %14 = vector.broadcast %cst_8 : f32 to vector<128x1xf32>
    %15 = arith.divf %13, %14 : vector<128x1xf32>
    %16 = vector.broadcast %8 : vector<128x1xf32> to vector<128x32xf32>
    %17 = arith.subf %2, %16 : vector<128x32xf32>
    %cst_9 = arith.constant 9.99999974E-6 : f32
    %18 = vector.broadcast %cst_9 : f32 to vector<128x1xf32>
    %19 = arith.addf %15, %18 : vector<128x1xf32>
    %20 = math.rsqrt %19 : vector<128x1xf32>
    %21 = vector.broadcast %20 : vector<128x1xf32> to vector<128x32xf32>
    %22 = arith.mulf %17, %21 : vector<128x32xf32>
    %23 = vector.extract_strided_slice %4 {offsets = [0, 0], sizes = [1, 32], strides = [1, 1]} : vector<2x32xf32> to vector<1x32xf32>
    %24 = vector.shape_cast %23 : vector<1x32xf32> to vector<32xf32>
    %25 = vector.shape_cast %24 : vector<32xf32> to vector<1x32xf32>
    %26 = vector.broadcast %25 : vector<1x32xf32> to vector<128x32xf32>
    %27 = arith.mulf %22, %26 : vector<128x32xf32>
    %28 = vector.extract_strided_slice %4 {offsets = [1, 0], sizes = [1, 32], strides = [1, 1]} : vector<2x32xf32> to vector<1x32xf32>
    %29 = vector.shape_cast %28 : vector<1x32xf32> to vector<32xf32>
    %30 = vector.shape_cast %29 : vector<32xf32> to vector<1x32xf32>
    %31 = vector.broadcast %30 : vector<1x32xf32> to vector<128x32xf32>
    %32 = arith.addf %27, %31 : vector<128x32xf32>
    %c0_10 = arith.constant 0 : index
    %c0_11 = arith.constant 0 : index
    %c0_12 = arith.constant 0 : index
    %33 = vector.load %arg4[%c0_10, %c0_11, %c0_12] : memref<5x32x32xf32, #tpu.memory_space<vmem>>, vector<1x32x32xf32>
    %34 = vector.shape_cast %33 : vector<1x32x32xf32> to vector<32x32xf32>
    %cst_13 = arith.constant dense<0.000000e+00> : vector<128x32xf32>
    %35 = tpu.matmul %32, %34, %cst_13 {dimension_numbers = #tpu.dot_dimension_numbers<[1], [0], [0], [1], [0, 0, 1, 1], [], []>} : vector<128x32xf32>, vector<32x32xf32>, vector<128x32xf32> -> vector<128x32xf32>
    %c0_14 = arith.constant 0 : index
    %c0_15 = arith.constant 0 : index
    %36 = vector.load %arg5[%c0_14, %c0_15] : memref<5x32xf32, #tpu.memory_space<vmem>>, vector<1x32xf32>
    %37 = vector.shape_cast %36 : vector<1x32xf32> to vector<32xf32>
    %38 = vector.shape_cast %37 : vector<32xf32> to vector<1x32xf32>
    %39 = vector.broadcast %38 : vector<1x32xf32> to vector<128x32xf32>
    %40 = arith.addf %35, %39 : vector<128x32xf32>
    %cst_16 = arith.constant 0.000000e+00 : f32
    %41 = vector.broadcast %cst_16 : f32 to vector<128x32xf32>
    %42 = arith.maximumf %40, %41 : vector<128x32xf32>
    %c1 = arith.constant 1 : index
    %c0_17 = arith.constant 0 : index
    %c0_18 = arith.constant 0 : index
    %43 = vector.load %arg4[%c1, %c0_17, %c0_18] : memref<5x32x32xf32, #tpu.memory_space<vmem>>, vector<1x32x32xf32>
    %44 = vector.shape_cast %43 : vector<1x32x32xf32> to vector<32x32xf32>
    %cst_19 = arith.constant dense<0.000000e+00> : vector<128x32xf32>
    %45 = tpu.matmul %42, %44, %cst_19 {dimension_numbers = #tpu.dot_dimension_numbers<[1], [0], [0], [1], [0, 0, 1, 1], [], []>} : vector<128x32xf32>, vector<32x32xf32>, vector<128x32xf32> -> vector<128x32xf32>
    %c1_20 = arith.constant 1 : index
    %c0_21 = arith.constant 0 : index
    %46 = vector.load %arg5[%c1_20, %c0_21] : memref<5x32xf32, #tpu.memory_space<vmem>>, vector<1x32xf32>
    %47 = vector.shape_cast %46 : vector<1x32xf32> to vector<32xf32>
    %48 = vector.shape_cast %47 : vector<32xf32> to vector<1x32xf32>
    %49 = vector.broadcast %48 : vector<1x32xf32> to vector<128x32xf32>
    %50 = arith.addf %45, %49 : vector<128x32xf32>
    %c1_22 = arith.constant 1 : index
    %c0_23 = arith.constant 0 : index
    %c0_24 = arith.constant 0 : index
    %51 = vector.load %arg8[%c1_22, %c0_23, %c0_24] : memref<4x2x32xf32, #tpu.memory_space<vmem>>, vector<1x2x32xf32>
    %52 = vector.shape_cast %51 : vector<1x2x32xf32> to vector<2x32xf32>
    %cst_25 = arith.constant dense<0.000000e+00> : vector<128xf32>
    %53 = vector.multi_reduction <add>, %50, %cst_25 [1] : vector<128x32xf32> to vector<128xf32>
    %54 = vector.shape_cast %53 : vector<128xf32> to vector<128x1xf32>
    %cst_26 = arith.constant 3.200000e+01 : f32
    %55 = vector.broadcast %cst_26 : f32 to vector<128x1xf32>
    %56 = arith.divf %54, %55 : vector<128x1xf32>
    %57 = vector.broadcast %56 : vector<128x1xf32> to vector<128x32xf32>
    %58 = arith.subf %50, %57 : vector<128x32xf32>
    %59 = arith.mulf %58, %58 : vector<128x32xf32>
    %cst_27 = arith.constant dense<0.000000e+00> : vector<128xf32>
    %60 = vector.multi_reduction <add>, %59, %cst_27 [1] : vector<128x32xf32> to vector<128xf32>
    %61 = vector.shape_cast %60 : vector<128xf32> to vector<128x1xf32>
    %cst_28 = arith.constant 3.200000e+01 : f32
    %62 = vector.broadcast %cst_28 : f32 to vector<128x1xf32>
    %63 = arith.divf %61, %62 : vector<128x1xf32>
    %64 = vector.broadcast %56 : vector<128x1xf32> to vector<128x32xf32>
    %65 = arith.subf %50, %64 : vector<128x32xf32>
    %cst_29 = arith.constant 9.99999974E-6 : f32
    %66 = vector.broadcast %cst_29 : f32 to vector<128x1xf32>
    %67 = arith.addf %63, %66 : vector<128x1xf32>
    %68 = math.rsqrt %67 : vector<128x1xf32>
    %69 = vector.broadcast %68 : vector<128x1xf32> to vector<128x32xf32>
    %70 = arith.mulf %65, %69 : vector<128x32xf32>
    %71 = vector.extract_strided_slice %52 {offsets = [0, 0], sizes = [1, 32], strides = [1, 1]} : vector<2x32xf32> to vector<1x32xf32>
    %72 = vector.shape_cast %71 : vector<1x32xf32> to vector<32xf32>
    %73 = vector.shape_cast %72 : vector<32xf32> to vector<1x32xf32>
    %74 = vector.broadcast %73 : vector<1x32xf32> to vector<128x32xf32>
    %75 = arith.mulf %70, %74 : vector<128x32xf32>
    %76 = vector.extract_strided_slice %52 {offsets = [1, 0], sizes = [1, 32], strides = [1, 1]} : vector<2x32xf32> to vector<1x32xf32>
    %77 = vector.shape_cast %76 : vector<1x32xf32> to vector<32xf32>
    %78 = vector.shape_cast %77 : vector<32xf32> to vector<1x32xf32>
    %79 = vector.broadcast %78 : vector<1x32xf32> to vector<128x32xf32>
    %80 = arith.addf %75, %79 : vector<128x32xf32>
    %c0_30 = arith.constant 0 : index
    %c0_31 = arith.constant 0 : index
    %81 = vector.load %arg6[%c0_30, %c0_31] : memref<32x64xf32, #tpu.memory_space<vmem>>, vector<32x64xf32>
    %cst_32 = arith.constant dense<0.000000e+00> : vector<128x64xf32>
    %82 = tpu.matmul %80, %81, %cst_32 {dimension_numbers = #tpu.dot_dimension_numbers<[1], [0], [0], [1], [0, 0, 1, 1], [], []>} : vector<128x32xf32>, vector<32x64xf32>, vector<128x64xf32> -> vector<128x64xf32>
    %c0_33 = arith.constant 0 : index
    %c0_34 = arith.constant 0 : index
    %83 = vector.load %arg7[%c0_33, %c0_34] : memref<1x64xf32, #tpu.memory_space<vmem>>, vector<1x64xf32>
    %84 = vector.broadcast %83 : vector<1x64xf32> to vector<128x64xf32>
    %85 = arith.addf %82, %84 : vector<128x64xf32>
    %86 = vector.extract_strided_slice %85 {offsets = [0, 0], sizes = [128, 32], strides = [1, 1]} : vector<128x64xf32> to vector<128x32xf32>
    %87 = vector.extract_strided_slice %85 {offsets = [0, 32], sizes = [128, 32], strides = [1, 1]} : vector<128x64xf32> to vector<128x32xf32>
    %c0_35 = arith.constant 0 : index
    %c0_36 = arith.constant 0 : index
    %88 = vector.load %arg3[%c0_35, %c0_36] : memref<8x32xf32, #tpu.memory_space<vmem>>, vector<8x32xf32>
    %c2 = arith.constant 2 : index
    %c0_37 = arith.constant 0 : index
    %c0_38 = arith.constant 0 : index
    %89 = vector.load %arg8[%c2, %c0_37, %c0_38] : memref<4x2x32xf32, #tpu.memory_space<vmem>>, vector<1x2x32xf32>
    %90 = vector.shape_cast %89 : vector<1x2x32xf32> to vector<2x32xf32>
    %cst_39 = arith.constant dense<0.000000e+00> : vector<8xf32>
    %91 = vector.multi_reduction <add>, %88, %cst_39 [1] : vector<8x32xf32> to vector<8xf32>
    %92 = vector.shape_cast %91 : vector<8xf32> to vector<8x1xf32>
    %cst_40 = arith.constant 3.200000e+01 : f32
    %93 = vector.broadcast %cst_40 : f32 to vector<8x1xf32>
    %94 = arith.divf %92, %93 : vector<8x1xf32>
    %95 = vector.broadcast %94 : vector<8x1xf32> to vector<8x32xf32>
    %96 = arith.subf %88, %95 : vector<8x32xf32>
    %97 = arith.mulf %96, %96 : vector<8x32xf32>
    %cst_41 = arith.constant dense<0.000000e+00> : vector<8xf32>
    %98 = vector.multi_reduction <add>, %97, %cst_41 [1] : vector<8x32xf32> to vector<8xf32>
    %99 = vector.shape_cast %98 : vector<8xf32> to vector<8x1xf32>
    %cst_42 = arith.constant 3.200000e+01 : f32
    %100 = vector.broadcast %cst_42 : f32 to vector<8x1xf32>
    %101 = arith.divf %99, %100 : vector<8x1xf32>
    %102 = vector.broadcast %94 : vector<8x1xf32> to vector<8x32xf32>
    %103 = arith.subf %88, %102 : vector<8x32xf32>
    %cst_43 = arith.constant 9.99999974E-6 : f32
    %104 = vector.broadcast %cst_43 : f32 to vector<8x1xf32>
    %105 = arith.addf %101, %104 : vector<8x1xf32>
    %106 = math.rsqrt %105 : vector<8x1xf32>
    %107 = vector.broadcast %106 : vector<8x1xf32> to vector<8x32xf32>
    %108 = arith.mulf %103, %107 : vector<8x32xf32>
    %109 = vector.extract_strided_slice %90 {offsets = [0, 0], sizes = [1, 32], strides = [1, 1]} : vector<2x32xf32> to vector<1x32xf32>
    %110 = vector.shape_cast %109 : vector<1x32xf32> to vector<32xf32>
    %111 = vector.shape_cast %110 : vector<32xf32> to vector<1x32xf32>
    %112 = vector.broadcast %111 : vector<1x32xf32> to vector<8x32xf32>
    %113 = arith.mulf %108, %112 : vector<8x32xf32>
    %114 = vector.extract_strided_slice %90 {offsets = [1, 0], sizes = [1, 32], strides = [1, 1]} : vector<2x32xf32> to vector<1x32xf32>
    %115 = vector.shape_cast %114 : vector<1x32xf32> to vector<32xf32>
    %116 = vector.shape_cast %115 : vector<32xf32> to vector<1x32xf32>
    %117 = vector.broadcast %116 : vector<1x32xf32> to vector<8x32xf32>
    %118 = arith.addf %113, %117 : vector<8x32xf32>
    %c2_44 = arith.constant 2 : index
    %c0_45 = arith.constant 0 : index
    %c0_46 = arith.constant 0 : index
    %119 = vector.load %arg4[%c2_44, %c0_45, %c0_46] : memref<5x32x32xf32, #tpu.memory_space<vmem>>, vector<1x32x32xf32>
    %120 = vector.shape_cast %119 : vector<1x32x32xf32> to vector<32x32xf32>
    %cst_47 = arith.constant dense<0.000000e+00> : vector<8x32xf32>
    %121 = tpu.matmul %118, %120, %cst_47 {dimension_numbers = #tpu.dot_dimension_numbers<[1], [0], [0], [1], [0, 0, 1, 1], [], []>} : vector<8x32xf32>, vector<32x32xf32>, vector<8x32xf32> -> vector<8x32xf32>
    %c2_48 = arith.constant 2 : index
    %c0_49 = arith.constant 0 : index
    %122 = vector.load %arg5[%c2_48, %c0_49] : memref<5x32xf32, #tpu.memory_space<vmem>>, vector<1x32xf32>
    %123 = vector.shape_cast %122 : vector<1x32xf32> to vector<32xf32>
    %124 = vector.shape_cast %123 : vector<32xf32> to vector<1x32xf32>
    %125 = vector.broadcast %124 : vector<1x32xf32> to vector<8x32xf32>
    %126 = arith.addf %121, %125 : vector<8x32xf32>
    %cst_50 = arith.constant dense<0.000000e+00> : vector<8x128xf32>
    %127 = tpu.matmul %126, %86, %cst_50 {dimension_numbers = #tpu.dot_dimension_numbers<[1], [1], [0], [0], [0, 0, 1, 0], [], []>} : vector<8x32xf32>, vector<128x32xf32>, vector<8x128xf32> -> vector<8x128xf32>
    %cst_51 = arith.constant 0.176776692 : f32
    %128 = vector.broadcast %cst_51 : f32 to vector<8x128xf32>
    %129 = arith.mulf %127, %128 : vector<8x128xf32>
    %cst_52 = arith.constant dense<0xFF800000> : vector<128xf32>
    %130 = vector.multi_reduction <maximumf>, %129, %cst_52 [0] : vector<8x128xf32> to vector<128xf32>
    %131 = vector.shape_cast %130 : vector<128xf32> to vector<1x128xf32>
    %132 = vector.broadcast %131 : vector<1x128xf32> to vector<8x128xf32>
    %133 = arith.subf %129, %132 : vector<8x128xf32>
    %134 = math.exp %133 : vector<8x128xf32>
    %cst_53 = arith.constant dense<0.000000e+00> : vector<128xf32>
    %135 = vector.multi_reduction <add>, %134, %cst_53 [0] : vector<8x128xf32> to vector<128xf32>
    %136 = vector.shape_cast %135 : vector<128xf32> to vector<1x128xf32>
    %137 = vector.broadcast %136 : vector<1x128xf32> to vector<8x128xf32>
    %138 = arith.divf %134, %137 : vector<8x128xf32>
    %cst_54 = arith.constant 9.99999993E-9 : f32
    %139 = vector.broadcast %cst_54 : f32 to vector<8x128xf32>
    %140 = arith.addf %138, %139 : vector<8x128xf32>
    %c0_55 = arith.constant 0 : index
    %c0_56 = arith.constant 0 : index
    %141 = vector.load %arg10[%c0_55, %c0_56] : memref<8x128xf32, #tpu.memory_space<vmem>>, vector<8x128xf32>
    tpu.vector_store %arg10[%c0_55, %c0_56], %140 {strides = array<i32>} : memref<8x128xf32, #tpu.memory_space<vmem>>, vector<8x128xf32>,
    %142 = vector.extract_strided_slice %140 {offsets = [0, 0], sizes = [8, 64], strides = [1, 1]} : vector<8x128xf32> to vector<8x64xf32>
    %cst_57 = arith.constant dense<0.000000e+00> : vector<8xf32>
    %143 = vector.multi_reduction <add>, %142, %cst_57 [1] : vector<8x64xf32> to vector<8xf32>
    %144 = vector.shape_cast %143 : vector<8xf32> to vector<8x1xf32>
    %145 = tpu.reciprocal %144 {approx = true} : vector<8x1xf32> -> vector<8x1xf32>
    %146 = vector.broadcast %145 : vector<8x1xf32> to vector<8x64xf32>
    %147 = arith.mulf %142, %146 : vector<8x64xf32>
    %148 = vector.extract_strided_slice %87 {offsets = [0, 0], sizes = [64, 32], strides = [1, 1]} : vector<128x32xf32> to vector<64x32xf32>
    %cst_58 = arith.constant dense<0.000000e+00> : vector<8x32xf32>
    %149 = tpu.matmul %147, %148, %cst_58 {dimension_numbers = #tpu.dot_dimension_numbers<[1], [0], [0], [1], [0, 0, 1, 1], [], []>} : vector<8x64xf32>, vector<64x32xf32>, vector<8x32xf32> -> vector<8x32xf32>
    %150 = vector.extract_strided_slice %149 {offsets = [0, 0], sizes = [4, 32], strides = [1, 1]} : vector<8x32xf32> to vector<4x32xf32>
    %151 = vector.extract_strided_slice %140 {offsets = [0, 64], sizes = [8, 64], strides = [1, 1]} : vector<8x128xf32> to vector<8x64xf32>
    %cst_59 = arith.constant dense<0.000000e+00> : vector<8xf32>
    %152 = vector.multi_reduction <add>, %151, %cst_59 [1] : vector<8x64xf32> to vector<8xf32>
    %153 = vector.shape_cast %152 : vector<8xf32> to vector<8x1xf32>
    %154 = tpu.reciprocal %153 {approx = true} : vector<8x1xf32> -> vector<8x1xf32>
    %155 = vector.broadcast %154 : vector<8x1xf32> to vector<8x64xf32>
    %156 = arith.mulf %151, %155 : vector<8x64xf32>
    %157 = vector.extract_strided_slice %87 {offsets = [64, 0], sizes = [64, 32], strides = [1, 1]} : vector<128x32xf32> to vector<64x32xf32>
    %cst_60 = arith.constant dense<0.000000e+00> : vector<8x32xf32>
    %158 = tpu.matmul %156, %157, %cst_60 {dimension_numbers = #tpu.dot_dimension_numbers<[1], [0], [0], [1], [0, 0, 1, 1], [], []>} : vector<8x64xf32>, vector<64x32xf32>, vector<8x32xf32> -> vector<8x32xf32>
    %159 = vector.extract_strided_slice %158 {offsets = [0, 0], sizes = [4, 32], strides = [1, 1]} : vector<8x32xf32> to vector<4x32xf32>
    %160 = tpu.concatenate %150, %159 in 0 : vector<4x32xf32>, vector<4x32xf32> -> vector<8x32xf32>
    %c3 = arith.constant 3 : index
    %c0_61 = arith.constant 0 : index
    %c0_62 = arith.constant 0 : index
    %161 = vector.load %arg8[%c3, %c0_61, %c0_62] : memref<4x2x32xf32, #tpu.memory_space<vmem>>, vector<1x2x32xf32>
    %162 = vector.shape_cast %161 : vector<1x2x32xf32> to vector<2x32xf32>
    %cst_63 = arith.constant dense<0.000000e+00> : vector<8xf32>
    %163 = vector.multi_reduction <add>, %160, %cst_63 [1] : vector<8x32xf32> to vector<8xf32>
    %164 = vector.shape_cast %163 : vector<8xf32> to vector<8x1xf32>
    %cst_64 = arith.constant 3.200000e+01 : f32
    %165 = vector.broadcast %cst_64 : f32 to vector<8x1xf32>
    %166 = arith.divf %164, %165 : vector<8x1xf32>
    %167 = vector.broadcast %166 : vector<8x1xf32> to vector<8x32xf32>
    %168 = arith.subf %160, %167 : vector<8x32xf32>
    %169 = arith.mulf %168, %168 : vector<8x32xf32>
    %cst_65 = arith.constant dense<0.000000e+00> : vector<8xf32>
    %170 = vector.multi_reduction <add>, %169, %cst_65 [1] : vector<8x32xf32> to vector<8xf32>
    %171 = vector.shape_cast %170 : vector<8xf32> to vector<8x1xf32>
    %cst_66 = arith.constant 3.200000e+01 : f32
    %172 = vector.broadcast %cst_66 : f32 to vector<8x1xf32>
    %173 = arith.divf %171, %172 : vector<8x1xf32>
    %174 = vector.broadcast %166 : vector<8x1xf32> to vector<8x32xf32>
    %175 = arith.subf %160, %174 : vector<8x32xf32>
    %cst_67 = arith.constant 9.99999974E-6 : f32
    %176 = vector.broadcast %cst_67 : f32 to vector<8x1xf32>
    %177 = arith.addf %173, %176 : vector<8x1xf32>
    %178 = math.rsqrt %177 : vector<8x1xf32>
    %179 = vector.broadcast %178 : vector<8x1xf32> to vector<8x32xf32>
    %180 = arith.mulf %175, %179 : vector<8x32xf32>
    %181 = vector.extract_strided_slice %162 {offsets = [0, 0], sizes = [1, 32], strides = [1, 1]} : vector<2x32xf32> to vector<1x32xf32>
    %182 = vector.shape_cast %181 : vector<1x32xf32> to vector<32xf32>
    %183 = vector.shape_cast %182 : vector<32xf32> to vector<1x32xf32>
    %184 = vector.broadcast %183 : vector<1x32xf32> to vector<8x32xf32>
    %185 = arith.mulf %180, %184 : vector<8x32xf32>
    %186 = vector.extract_strided_slice %162 {offsets = [1, 0], sizes = [1, 32], strides = [1, 1]} : vector<2x32xf32> to vector<1x32xf32>
    %187 = vector.shape_cast %186 : vector<1x32xf32> to vector<32xf32>
    %188 = vector.shape_cast %187 : vector<32xf32> to vector<1x32xf32>
    %189 = vector.broadcast %188 : vector<1x32xf32> to vector<8x32xf32>
    %190 = arith.addf %185, %189 : vector<8x32xf32>
    %c3_68 = arith.constant 3 : index
    %c0_69 = arith.constant 0 : index
    %c0_70 = arith.constant 0 : index
    %191 = vector.load %arg4[%c3_68, %c0_69, %c0_70] : memref<5x32x32xf32, #tpu.memory_space<vmem>>, vector<1x32x32xf32>
    %192 = vector.shape_cast %191 : vector<1x32x32xf32> to vector<32x32xf32>
    %cst_71 = arith.constant dense<0.000000e+00> : vector<8x32xf32>
    %193 = tpu.matmul %190, %192, %cst_71 {dimension_numbers = #tpu.dot_dimension_numbers<[1], [0], [0], [1], [0, 0, 1, 1], [], []>} : vector<8x32xf32>, vector<32x32xf32>, vector<8x32xf32> -> vector<8x32xf32>
    %c3_72 = arith.constant 3 : index
    %c0_73 = arith.constant 0 : index
    %194 = vector.load %arg5[%c3_72, %c0_73] : memref<5x32xf32, #tpu.memory_space<vmem>>, vector<1x32xf32>
    %195 = vector.shape_cast %194 : vector<1x32xf32> to vector<32xf32>
    %196 = vector.shape_cast %195 : vector<32xf32> to vector<1x32xf32>
    %197 = vector.broadcast %196 : vector<1x32xf32> to vector<8x32xf32>
    %198 = arith.addf %193, %197 : vector<8x32xf32>
    %cst_74 = arith.constant 0.000000e+00 : f32
    %199 = vector.broadcast %cst_74 : f32 to vector<8x32xf32>
    %200 = arith.maximumf %198, %199 : vector<8x32xf32>
    %c4 = arith.constant 4 : index
    %c0_75 = arith.constant 0 : index
    %c0_76 = arith.constant 0 : index
    %201 = vector.load %arg4[%c4, %c0_75, %c0_76] : memref<5x32x32xf32, #tpu.memory_space<vmem>>, vector<1x32x32xf32>
    %202 = vector.shape_cast %201 : vector<1x32x32xf32> to vector<32x32xf32>
    %cst_77 = arith.constant dense<0.000000e+00> : vector<8x32xf32>
    %203 = tpu.matmul %200, %202, %cst_77 {dimension_numbers = #tpu.dot_dimension_numbers<[1], [0], [0], [1], [0, 0, 1, 1], [], []>} : vector<8x32xf32>, vector<32x32xf32>, vector<8x32xf32> -> vector<8x32xf32>
    %c4_78 = arith.constant 4 : index
    %c0_79 = arith.constant 0 : index
    %204 = vector.load %arg5[%c4_78, %c0_79] : memref<5x32xf32, #tpu.memory_space<vmem>>, vector<1x32xf32>
    %205 = vector.shape_cast %204 : vector<1x32xf32> to vector<32xf32>
    %206 = vector.shape_cast %205 : vector<32xf32> to vector<1x32xf32>
    %207 = vector.broadcast %206 : vector<1x32xf32> to vector<8x32xf32>
    %208 = arith.addf %203, %207 : vector<8x32xf32>
    %209 = arith.addf %160, %208 : vector<8x32xf32>
    %c0_80 = arith.constant 0 : index
    %c0_81 = arith.constant 0 : index
    %210 = vector.load %arg9[%c0_80, %c0_81] : memref<8x32xf32, #tpu.memory_space<vmem>>, vector<8x32xf32>
    tpu.vector_store %arg9[%c0_80, %c0_81], %209 {strides = array<i32>} : memref<8x32xf32, #tpu.memory_space<vmem>>, vector<8x32xf32>,
    return
  }
  func.func @transform_0(%arg0: i32) -> (i32, i32) {
    %c0_i32 = arith.constant 0 : i32
    %c0_i32_0 = arith.constant 0 : i32
    %c0_i32_1 = arith.constant 0 : i32
    return %c0_i32, %c0_i32_0 : i32, i32
  }
  func.func @transform_1(%arg0: i32) -> (i32, i32) {
    %c0_i32 = arith.constant 0 : i32
    %c0_i32_0 = arith.constant 0 : i32
    %c0_i32_1 = arith.constant 0 : i32
    return %c0_i32, %c0_i32_0 : i32, i32
  }
  func.func @transform_2(%arg0: i32) -> (i32, i32) {
    %c0_i32 = arith.constant 0 : i32
    %c0_i32_0 = arith.constant 0 : i32
    %c0_i32_1 = arith.constant 0 : i32
    return %c0_i32, %c0_i32_0 : i32, i32
  }
  func.func @transform_3(%arg0: i32) -> (i32, i32, i32) {
    %c0_i32 = arith.constant 0 : i32
    %c0_i32_0 = arith.constant 0 : i32
    %c0_i32_1 = arith.constant 0 : i32
    %c0_i32_2 = arith.constant 0 : i32
    return %c0_i32, %c0_i32_0, %c0_i32_1 : i32, i32, i32
  }
  func.func @transform_4(%arg0: i32) -> (i32, i32) {
    %c0_i32 = arith.constant 0 : i32
    %c0_i32_0 = arith.constant 0 : i32
    %c0_i32_1 = arith.constant 0 : i32
    return %c0_i32, %c0_i32_0 : i32, i32
  }
  func.func @transform_5(%arg0: i32) -> (i32, i32) {
    %c0_i32 = arith.constant 0 : i32
    %c0_i32_0 = arith.constant 0 : i32
    %c0_i32_1 = arith.constant 0 : i32
    return %c0_i32, %c0_i32_0 : i32, i32
  }
  func.func @transform_6(%arg0: i32) -> (i32, i32) {
    %c0_i32 = arith.constant 0 : i32
    %c0_i32_0 = arith.constant 0 : i32
    %c0_i32_1 = arith.constant 0 : i32
    return %c0_i32, %c0_i32_0 : i32, i32
  }
  func.func @transform_7(%arg0: i32) -> (i32, i32, i32) {
    %c0_i32 = arith.constant 0 : i32
    %c0_i32_0 = arith.constant 0 : i32
    %c0_i32_1 = arith.constant 0 : i32
    %c0_i32_2 = arith.constant 0 : i32
    return %c0_i32, %c0_i32_0, %c0_i32_1 : i32, i32, i32
  }
  func.func @transform_8(%arg0: i32) -> (i32, i32) {
    %c0_i32 = arith.constant 0 : i32
    %c0_i32_0 = arith.constant 0 : i32
    %c0_i32_1 = arith.constant 0 : i32
    return %c0_i32, %c0_i32_0 : i32, i32
  }
  func.func @transform_9(%arg0: i32) -> (i32, i32) {
    %c0_i32 = arith.constant 0 : i32
    %c0_i32_0 = arith.constant 0 : i32
    %c0_i32_1 = arith.constant 0 : i32
    return %c0_i32, %c0_i32_0 : i32, i32
  }
}

</mosaic_0001>

<llo_original>
// kernel: tpu_custom_call.1
$region0: #{tpu_custom_call.1}
  #allocation0 [shape = 'u32[]', space=smem, size = 0x4, offset = 0x4, fixed_abs, tag = 'smem constant byte address 0x4 - core index']
  #allocation1 [shape = 'u32[144,128]{1,0:T(1,128)}', space=vmem, size = 0x12000, scoped, tag = 'internal scratch']
  %s0 = inlined_call_operand.vmem [shape: f32[128,32], index: 0, kind: input, shape index: {}]
  %s1 = inlined_call_operand.vmem [shape: f32[128,32], index: 1, kind: input, shape index: {}]
  %s2 = inlined_call_operand.vmem [shape: f32[8,32], index: 2, kind: input, shape index: {}]
  %s3 = inlined_call_operand.vmem [shape: f32[5,32,32], index: 3, kind: input, shape index: {}]
  %s4 = inlined_call_operand.vmem [shape: f32[5,32], index: 4, kind: input, shape index: {}]
  %s5 = inlined_call_operand.vmem [shape: f32[32,64], index: 5, kind: input, shape index: {}]
  %s6 = inlined_call_operand.vmem [shape: f32[1,64], index: 6, kind: input, shape index: {}]
  %s7 = inlined_call_operand.vmem [shape: f32[4,2,32], index: 7, kind: input, shape index: {}]
  %s8 = inlined_call_operand.hbm [shape: f32[8,32], index: 8, kind: output, shape index: {0}]
  %s9 = inlined_call_operand.hbm [shape: f32[8,128], index: 9, kind: output, shape index: {1}]
  %10 = xla_tuple %s8, %s9
  %s11 = sld [smem:[#allocation0]]
  $region50: #{tpu_custom_call.1} parent=0
    _
  %s13 = ssub.s32 1, %s11
  %s14 = scalar_select 0, %s13, %s11
  $region1: #{tpu_custom_call.1} parent=0
    #allocation2 [shape = 'u8[4096]{0}', space=vmem, size = 0x1000, scoped, tag = 'output window, operand 0, single buffered']
    #allocation3 [shape = 's32[1]{0}', space=sflag, size = 0x4, scoped, tag = 'scoped memory for tpu_custom_call.1']
    #allocation4 [shape = 'u8[4096]{0}', space=vmem, size = 0x1000, scoped, tag = 'output window, operand 1, single buffered']
    #allocation5 [shape = 's32[1]{0}', space=sflag, size = 0x4, scoped, tag = 'scoped memory for tpu_custom_call.1']
    %15 = vsyncpa [#allocation3], 0
    %16 = vsyncpa [#allocation5], 0
    // Predicated region
    $region2: #{tpu_custom_call.1} parent=1 // pred_check
      _
    $region3: #{tpu_custom_call.1} parent=1 // pred_check_branch
      %18 = sbr.rel (0) target = $region5
    $region4: #{tpu_custom_call.1} parent=1 // pred_region
      _
    $region5: #{tpu_custom_call.1} parent=1 // pred_fallthru
      _
    // Predicated region
    $region6: #{tpu_custom_call.1} parent=1 // pred_check
      _
    $region7: #{tpu_custom_call.1} parent=1 // pred_check_branch
      %20 = sbr.rel (0) target = $region9
    $region8: #{tpu_custom_call.1} parent=1 // pred_region
      _
    $region9: #{tpu_custom_call.1} parent=1 // pred_fallthru
      _
    // Predicated region
    $region10: #{tpu_custom_call.1} parent=1 // pred_check
      _
    $region11: #{tpu_custom_call.1} parent=1 // pred_check_branch
      %22 = sbr.rel (0) target = $region13
    $region12: #{tpu_custom_call.1} parent=1 // pred_region
      _
    $region13: #{tpu_custom_call.1} parent=1 // pred_fallthru
      _
    // Predicated region
    $region14: #{tpu_custom_call.1} parent=1 // pred_check
      _
    $region15: #{tpu_custom_call.1} parent=1 // pred_check_branch
      %24 = sbr.rel (0) target = $region17
    $region16: #{tpu_custom_call.1} parent=1 // pred_region
      _
    $region17: #{tpu_custom_call.1} parent=1 // pred_fallthru
      _
    // Predicated region
    $region18: #{tpu_custom_call.1} parent=1 // pred_check
      _
    $region19: #{tpu_custom_call.1} parent=1 // pred_check_branch
      %26 = sbr.rel (0) target = $region21
    $region20: #{tpu_custom_call.1} parent=1 // pred_region
      _
    $region21: #{tpu_custom_call.1} parent=1 // pred_fallthru
      _
    // Predicated region
    $region22: #{tpu_custom_call.1} parent=1 // pred_check
      _
    $region23: #{tpu_custom_call.1} parent=1 // pred_check_branch
      %28 = sbr.rel (0) target = $region25
    $region24: #{tpu_custom_call.1} parent=1 // pred_region
      _
    $region25: #{tpu_custom_call.1} parent=1 // pred_fallthru
      _
    // Predicated region
    $region26: #{tpu_custom_call.1} parent=1 // pred_check
      _
    $region27: #{tpu_custom_call.1} parent=1 // pred_check_branch
      %30 = sbr.rel (0) target = $region29
    $region28: #{tpu_custom_call.1} parent=1 // pred_region
      _
    $region29: #{tpu_custom_call.1} parent=1 // pred_fallthru
      _
    // Predicated region
    $region30: #{tpu_custom_call.1} parent=1 // pred_check
      _
    $region31: #{tpu_custom_call.1} parent=1 // pred_check_branch
      %32 = sbr.rel (0) target = $region33
    $region32: #{tpu_custom_call.1} parent=1 // pred_region
      _
    $region33: #{tpu_custom_call.1} parent=1 // pred_fallthru
      _
    %v33 = vld [vmem:[%s0] sm:$0xff]
    %v34 = vld [vmem:[%s0 + $0x8] sm:$0xff]
    %v35 = vld [vmem:[%s0 + $0x10] sm:$0xff]
    %v36 = vld [vmem:[%s0 + $0x18] sm:$0xff]
    %v37 = vld [vmem:[%s0 + $0x20] sm:$0xff]
    %v38 = vld [vmem:[%s0 + $0x28] sm:$0xff]
    %v39 = vld [vmem:[%s0 + $0x30] sm:$0xff]
    %v40 = vld [vmem:[%s0 + $0x38] sm:$0xff]
    %v41 = vld [vmem:[%s0 + $0x40] sm:$0xff]
    %v42 = vld [vmem:[%s0 + $0x48] sm:$0xff]
    %v43 = vld [vmem:[%s0 + $0x50] sm:$0xff]
    %v44 = vld [vmem:[%s0 + $0x58] sm:$0xff]
    %v45 = vld [vmem:[%s0 + $0x60] sm:$0xff]
    %v46 = vld [vmem:[%s0 + $0x68] sm:$0xff]
    %v47 = vld [vmem:[%s0 + $0x70] sm:$0xff]
    %v48 = vld [vmem:[%s0 + $0x78] sm:$0xff]
    %v49 = vld [vmem:[%s1] sm:$0xff]
    %v50 = vld [vmem:[%s1 + $0x8] sm:$0xff]
    %v51 = vld [vmem:[%s1 + $0x10] sm:$0xff]
    %v52 = vld [vmem:[%s1 + $0x18] sm:$0xff]
    %v53 = vld [vmem:[%s1 + $0x20] sm:$0xff]
    %v54 = vld [vmem:[%s1 + $0x28] sm:$0xff]
    %v55 = vld [vmem:[%s1 + $0x30] sm:$0xff]
    %v56 = vld [vmem:[%s1 + $0x38] sm:$0xff]
    %v57 = vld [vmem:[%s1 + $0x40] sm:$0xff]
    %v58 = vld [vmem:[%s1 + $0x48] sm:$0xff]
    %v59 = vld [vmem:[%s1 + $0x50] sm:$0xff]
    %v60 = vld [vmem:[%s1 + $0x58] sm:$0xff]
    %v61 = vld [vmem:[%s1 + $0x60] sm:$0xff]
    %v62 = vld [vmem:[%s1 + $0x68] sm:$0xff]
    %v63 = vld [vmem:[%s1 + $0x70] sm:$0xff]
    %v64 = vld [vmem:[%s1 + $0x78] sm:$0xff]
    %v65 = vadd.f32 %v33, %v49
    %v66 = vadd.f32 %v34, %v50
    %v67 = vadd.f32 %v35, %v51
    %v68 = vadd.f32 %v36, %v52
    %v69 = vadd.f32 %v37, %v53
    %v70 = vadd.f32 %v38, %v54
    %v71 = vadd.f32 %v39, %v55
    %v72 = vadd.f32 %v40, %v56
    %v73 = vadd.f32 %v41, %v57
    %v74 = vadd.f32 %v42, %v58
    %v75 = vadd.f32 %v43, %v59
    %v76 = vadd.f32 %v44, %v60
    %v77 = vadd.f32 %v45, %v61
    %v78 = vadd.f32 %v46, %v62
    %v79 = vadd.f32 %v47, %v63
    %v80 = vadd.f32 %v48, %v64
    %v81 = vld [vmem:[%s7] sm:$0x3]
    %vm82 = vcmask 261120
    %v83 = vsel %vm82, %v65, 0.0
    %84 = vadd.xlane.f32.xlu0 %v83
    %v85 = vpop.xlane.xlu0 %84
    %v86 = vsel %vm82, %v66, 0.0
    %87 = vadd.xlane.f32.xlu0 %v86
    %v88 = vpop.xlane.xlu0 %87
    %v89 = vsel %vm82, %v67, 0.0
    %90 = vadd.xlane.f32.xlu0 %v89
    %v91 = vpop.xlane.xlu0 %90
    %v92 = vsel %vm82, %v68, 0.0
    %93 = vadd.xlane.f32.xlu0 %v92
    %v94 = vpop.xlane.xlu0 %93
    %v95 = vsel %vm82, %v69, 0.0
    %96 = vadd.xlane.f32.xlu0 %v95
    %v97 = vpop.xlane.xlu0 %96
    %v98 = vsel %vm82, %v70, 0.0
    %99 = vadd.xlane.f32.xlu0 %v98
    %v100 = vpop.xlane.xlu0 %99
    %v101 = vsel %vm82, %v71, 0.0
    %102 = vadd.xlane.f32.xlu0 %v101
    %v103 = vpop.xlane.xlu0 %102
    %v104 = vsel %vm82, %v72, 0.0
    %105 = vadd.xlane.f32.xlu0 %v104
    %v106 = vpop.xlane.xlu0 %105
    %v107 = vsel %vm82, %v73, 0.0
    %108 = vadd.xlane.f32.xlu0 %v107
    %v109 = vpop.xlane.xlu0 %108
    %v110 = vsel %vm82, %v74, 0.0
    %111 = vadd.xlane.f32.xlu0 %v110
    %v112 = vpop.xlane.xlu0 %111
    %v113 = vsel %vm82, %v75, 0.0
    %114 = vadd.xlane.f32.xlu0 %v113
    %v115 = vpop.xlane.xlu0 %114
    %v116 = vsel %vm82, %v76, 0.0
    %117 = vadd.xlane.f32.xlu0 %v116
    %v118 = vpop.xlane.xlu0 %117
    %v119 = vsel %vm82, %v77, 0.0
    %120 = vadd.xlane.f32.xlu0 %v119
    %v121 = vpop.xlane.xlu0 %120
    %v122 = vsel %vm82, %v78, 0.0
    %123 = vadd.xlane.f32.xlu0 %v122
    %v124 = vpop.xlane.xlu0 %123
    %v125 = vsel %vm82, %v79, 0.0
    %126 = vadd.xlane.f32.xlu0 %v125
    %v127 = vpop.xlane.xlu0 %126
    %v128 = vsel %vm82, %v80, 0.0
    %129 = vadd.xlane.f32.xlu0 %v128
    %v130 = vpop.xlane.xlu0 %129
    %v131 = vrcp.pop 32.0
    %v132 = vmul.f32 %v85, %v131
    %v133 = vmul.f32 %v88, %v131
    %v134 = vmul.f32 %v91, %v131
    %v135 = vmul.f32 %v94, %v131
    %v136 = vmul.f32 %v97, %v131
    %v137 = vmul.f32 %v100, %v131
    %v138 = vmul.f32 %v103, %v131
    %v139 = vmul.f32 %v106, %v131
    %v140 = vmul.f32 %v109, %v131
    %v141 = vmul.f32 %v112, %v131
    %v142 = vmul.f32 %v115, %v131
    %v143 = vmul.f32 %v118, %v131
    %v144 = vmul.f32 %v121, %v131
    %v145 = vmul.f32 %v124, %v131
    %v146 = vmul.f32 %v127, %v131
    %v147 = vmul.f32 %v130, %v131
    %v148 = vsub.f32 %v65, %v132
    %v149 = vsub.f32 %v66, %v133
    %v150 = vsub.f32 %v67, %v134
    %v151 = vsub.f32 %v68, %v135
    %v152 = vsub.f32 %v69, %v136
    %v153 = vsub.f32 %v70, %v137
    %v154 = vsub.f32 %v71, %v138
    %v155 = vsub.f32 %v72, %v139
    %v156 = vsub.f32 %v73, %v140
    %v157 = vsub.f32 %v74, %v141
    %v158 = vsub.f32 %v75, %v142
    %v159 = vsub.f32 %v76, %v143
    %v160 = vsub.f32 %v77, %v144
    %v161 = vsub.f32 %v78, %v145
    %v162 = vsub.f32 %v79, %v146
    %v163 = vsub.f32 %v80, %v147
    %v164 = vmul.f32 %v148, %v148
    %v165 = vmul.f32 %v149, %v149
    %v166 = vmul.f32 %v150, %v150
    %v167 = vmul.f32 %v151, %v151
    %v168 = vmul.f32 %v152, %v152
    %v169 = vmul.f32 %v153, %v153
    %v170 = vmul.f32 %v154, %v154
    %v171 = vmul.f32 %v155, %v155
    %v172 = vmul.f32 %v156, %v156
    %v173 = vmul.f32 %v157, %v157
    %v174 = vmul.f32 %v158, %v158
    %v175 = vmul.f32 %v159, %v159
    %v176 = vmul.f32 %v160, %v160
    %v177 = vmul.f32 %v161, %v161
    %v178 = vmul.f32 %v162, %v162
    %v179 = vmul.f32 %v163, %v163
    %v180 = vsel %vm82, %v164, 0.0
    %181 = vadd.xlane.f32.xlu0 %v180
    %v182 = vpop.xlane.xlu0 %181
    %v183 = vsel %vm82, %v165, 0.0
    %184 = vadd.xlane.f32.xlu0 %v183
    %v185 = vpop.xlane.xlu0 %184
    %v186 = vsel %vm82, %v166, 0.0
    %187 = vadd.xlane.f32.xlu0 %v186
    %v188 = vpop.xlane.xlu0 %187
    %v189 = vsel %vm82, %v167, 0.0
    %190 = vadd.xlane.f32.xlu0 %v189
    %v191 = vpop.xlane.xlu0 %190
    %v192 = vsel %vm82, %v168, 0.0
    %193 = vadd.xlane.f32.xlu0 %v192
    %v194 = vpop.xlane.xlu0 %193
    %v195 = vsel %vm82, %v169, 0.0
    %196 = vadd.xlane.f32.xlu0 %v195
    %v197 = vpop.xlane.xlu0 %196
    %v198 = vsel %vm82, %v170, 0.0
    %199 = vadd.xlane.f32.xlu0 %v198
    %v200 = vpop.xlane.xlu0 %199
    %v201 = vsel %vm82, %v171, 0.0
    %202 = vadd.xlane.f32.xlu0 %v201
    %v203 = vpop.xlane.xlu0 %202
    %v204 = vsel %vm82, %v172, 0.0
    %205 = vadd.xlane.f32.xlu0 %v204
    %v206 = vpop.xlane.xlu0 %205
    %v207 = vsel %vm82, %v173, 0.0
    %208 = vadd.xlane.f32.xlu0 %v207
    %v209 = vpop.xlane.xlu0 %208
    %v210 = vsel %vm82, %v174, 0.0
    %211 = vadd.xlane.f32.xlu0 %v210
    %v212 = vpop.xlane.xlu0 %211
    %v213 = vsel %vm82, %v175, 0.0
    %214 = vadd.xlane.f32.xlu0 %v213
    %v215 = vpop.xlane.xlu0 %214
    %v216 = vsel %vm82, %v176, 0.0
    %217 = vadd.xlane.f32.xlu0 %v216
    %v218 = vpop.xlane.xlu0 %217
    %v219 = vsel %vm82, %v177, 0.0
    %220 = vadd.xlane.f32.xlu0 %v219
    %v221 = vpop.xlane.xlu0 %220
    %v222 = vsel %vm82, %v178, 0.0
    %223 = vadd.xlane.f32.xlu0 %v222
    %v224 = vpop.xlane.xlu0 %223
    %v225 = vsel %vm82, %v179, 0.0
    %226 = vadd.xlane.f32.xlu0 %v225
    %v227 = vpop.xlane.xlu0 %226
    %v228 = vmul.f32 %v182, %v131
    %v229 = vmul.f32 %v185, %v131
    %v230 = vmul.f32 %v188, %v131
    %v231 = vmul.f32 %v191, %v131
    %v232 = vmul.f32 %v194, %v131
    %v233 = vmul.f32 %v197, %v131
    %v234 = vmul.f32 %v200, %v131
    %v235 = vmul.f32 %v203, %v131
    %v236 = vmul.f32 %v206, %v131
    %v237 = vmul.f32 %v209, %v131
    %v238 = vmul.f32 %v212, %v131
    %v239 = vmul.f32 %v215, %v131
    %v240 = vmul.f32 %v218, %v131
    %v241 = vmul.f32 %v221, %v131
    %v242 = vmul.f32 %v224, %v131
    %v243 = vmul.f32 %v227, %v131
    %v244 = vadd.f32 %v228, 1e-05
    %v245 = vadd.f32 %v229, 1e-05
    %v246 = vadd.f32 %v230, 1e-05
    %v247 = vadd.f32 %v231, 1e-05
    %v248 = vadd.f32 %v232, 1e-05
    %v249 = vadd.f32 %v233, 1e-05
    %v250 = vadd.f32 %v234, 1e-05
    %v251 = vadd.f32 %v235, 1e-05
    %v252 = vadd.f32 %v236, 1e-05
    %v253 = vadd.f32 %v237, 1e-05
    %v254 = vadd.f32 %v238, 1e-05
    %v255 = vadd.f32 %v239, 1e-05
    %v256 = vadd.f32 %v240, 1e-05
    %v257 = vadd.f32 %v241, 1e-05
    %v258 = vadd.f32 %v242, 1e-05
    %v259 = vadd.f32 %v243, 1e-05
    %v260 = vrsqrt.pop %v244
    %v261 = vrsqrt.pop %v245
    %v262 = vrsqrt.pop %v246
    %v263 = vrsqrt.pop %v247
    %v264 = vrsqrt.pop %v248
    %v265 = vrsqrt.pop %v249
    %v266 = vrsqrt.pop %v250
    %v267 = vrsqrt.pop %v251
    %v268 = vrsqrt.pop %v252
    %v269 = vrsqrt.pop %v253
    %v270 = vrsqrt.pop %v254
    %v271 = vrsqrt.pop %v255
    %v272 = vrsqrt.pop %v256
    %v273 = vrsqrt.pop %v257
    %v274 = vrsqrt.pop %v258
    %v275 = vrsqrt.pop %v259
    %v276 = vmul.f32 %v148, %v260
    %v277 = vmul.f32 %v149, %v261
    %v278 = vmul.f32 %v150, %v262
    %v279 = vmul.f32 %v151, %v263
    %v280 = vmul.f32 %v152, %v264
    %v281 = vmul.f32 %v153, %v265
    %v282 = vmul.f32 %v154, %v266
    %v283 = vmul.f32 %v155, %v267
    %v284 = vmul.f32 %v156, %v268
    %v285 = vmul.f32 %v157, %v269
    %v286 = vmul.f32 %v158, %v270
    %v287 = vmul.f32 %v159, %v271
    %v288 = vmul.f32 %v160, %v272
    %v289 = vmul.f32 %v161, %v273
    %v290 = vmul.f32 %v162, %v274
    %v291 = vmul.f32 %v163, %v275
    %v292 = vlaneseq
    %v293 = vshrl.u32 %v292, 7
    %v294 = vsub.s32 0, %v293
    %v295 = vrot.slane %v81, %v294
    %v296 = vmul.f32 %v276, %v295
    %v297 = vmul.f32 %v277, %v295
    %v298 = vmul.f32 %v278, %v295
    %v299 = vmul.f32 %v279, %v295
    %v300 = vmul.f32 %v280, %v295
    %v301 = vmul.f32 %v281, %v295
    %v302 = vmul.f32 %v282, %v295
    %v303 = vmul.f32 %v283, %v295
    %v304 = vmul.f32 %v284, %v295
    %v305 = vmul.f32 %v285, %v295
    %v306 = vmul.f32 %v286, %v295
    %v307 = vmul.f32 %v287, %v295
    %v308 = vmul.f32 %v288, %v295
    %v309 = vmul.f32 %v289, %v295
    %v310 = vmul.f32 %v290, %v295
    %v311 = vmul.f32 %v291, %v295
    %v312 = vlaneseq
    %v313 = vshrl.u32 %v312, 7
    %v314 = vsub.s32 1, %v313
    %v315 = vrot.slane %v81, %v314
    %v316 = vadd.f32 %v296, %v315
    %v317 = vadd.f32 %v297, %v315
    %v318 = vadd.f32 %v298, %v315
    %v319 = vadd.f32 %v299, %v315
    %v320 = vadd.f32 %v300, %v315
    %v321 = vadd.f32 %v301, %v315
    %v322 = vadd.f32 %v302, %v315
    %v323 = vadd.f32 %v303, %v315
    %v324 = vadd.f32 %v304, %v315
    %v325 = vadd.f32 %v305, %v315
    %v326 = vadd.f32 %v306, %v315
    %v327 = vadd.f32 %v307, %v315
    %v328 = vadd.f32 %v308, %v315
    %v329 = vadd.f32 %v309, %v315
    %v330 = vadd.f32 %v310, %v315
    %v331 = vadd.f32 %v311, %v315
    %v332 = vld [vmem:[%s3] sm:$0xff]
    %v333 = vld [vmem:[%s3 + $0x8] sm:$0xff]
    %v334 = vld [vmem:[%s3 + $0x10] sm:$0xff]
    %v335 = vld [vmem:[%s3 + $0x18] sm:$0xff]
    %v336 = vld [vmem:[%s4] sm:$0x1]
    %v337 = vlaneseq
    %v338 = vshrl.u32 %v337, 7
    %v339 = vsub.s32 0, %v338
    %v340 = vrot.slane %v336, %v339
    %v342 = vsel %vm82, %v316, 0
    %v345 = vsel %vm82, %v317, 0
    %v348 = vsel %vm82, %v318, 0
    %v351 = vsel %vm82, %v319, 0
    %v354 = vsel %vm82, %v320, 0
    %v357 = vsel %vm82, %v321, 0
    %v360 = vsel %vm82, %v322, 0
    %v363 = vsel %vm82, %v323, 0
    %v366 = vsel %vm82, %v324, 0
    %v369 = vsel %vm82, %v325, 0
    %v372 = vsel %vm82, %v326, 0
    %v375 = vsel %vm82, %v327, 0
    %v378 = vsel %vm82, %v328, 0
    %v381 = vsel %vm82, %v329, 0
    %v384 = vsel %vm82, %v330, 0
    %v387 = vsel %vm82, %v331, 0
    %389 = vmatprep.subr.mxu0 0.0
    %390 = vmatpush1.msra.mxu0 %v332
    %391 = vmatprep.subr.mxu0 0.0
    %392 = vmatpush1.msra.mxu0 %v333
    %393 = vmatprep.subr.mxu0 0.0
    %394 = vmatpush1.msra.mxu0 %v334
    %395 = vmatprep.subr.mxu0 0.0
    %396 = vmatpush1.msra.mxu0 %v335
    %397 = vmatprep.subr.mxu0 0.0
    %398 = vmatpush1.msra.mxu0 0.0
    %399 = vmatprep.subr.mxu0 0.0
    %400 = vmatpush1.msra.mxu0 0.0
    %401 = vmatprep.subr.mxu0 0.0
    %402 = vmatpush1.msra.mxu0 0.0
    %403 = vmatprep.subr.mxu0 0.0
    %404 = vmatpush1.msra.mxu0 0.0
    %405 = vmatprep.subr.mxu0 0.0
    %406 = vmatpush1.msra.mxu0 0.0
    %407 = vmatprep.subr.mxu0 0.0
    %408 = vmatpush1.msra.mxu0 0.0
    %409 = vmatprep.subr.mxu0 0.0
    %410 = vmatpush1.msra.mxu0 0.0
    %411 = vmatprep.subr.mxu0 0.0
    %412 = vmatpush1.msra.mxu0 0.0
    %413 = vmatprep.subr.mxu0 0.0
    %414 = vmatpush1.msra.mxu0 0.0
    %415 = vmatprep.subr.mxu0 0.0
    %416 = vmatpush1.msra.mxu0 0.0
    %417 = vmatprep.subr.mxu0 0.0
    %418 = vmatpush1.msra.mxu0 0.0
    %419 = vmatprep.subr.mxu0 0.0
    %420 = vmatpush1.msra.mxu0 0.0
    %421 = vmatprep.subr.mxu0 0.0
    %422 = vmatpush1.msra.mxu0 0.0
    %423 = vmatprep.subr.mxu0 0.0
    %424 = vmatpush1.msra.mxu0 0.0
    %425 = vmatprep.subr.mxu0 0.0
    %426 = vmatpush1.msra.mxu0 0.0
    %427 = vmatprep.subr.mxu0 0.0
    %428 = vmatpush1.msra.mxu0 0.0
    %429 = vmatprep.subr.mxu0 0.0
    %430 = vmatpush1.msra.mxu0 0.0
    %431 = vmatprep.subr.mxu0 0.0
    %432 = vmatpush1.msra.mxu0 0.0
    %433 = vmatprep.subr.mxu0 0.0
    %434 = vmatpush1.msra.mxu0 0.0
    %435 = vmatprep.subr.mxu0 0.0
    %436 = vmatpush1.msra.mxu0 0.0
    %437 = vmatprep.subr.mxu0 0.0
    %438 = vmatpush1.msra.mxu0 0.0
    %439 = vmatprep.subr.mxu0 0.0
    %440 = vmatpush1.msra.mxu0 0.0
    %441 = vmatprep.subr.mxu0 0.0
    %442 = vmatpush1.msra.mxu0 0.0
    %443 = vmatprep.subr.mxu0 0.0
    %444 = vmatpush1.msra.mxu0 0.0
    %445 = vmatprep.subr.mxu0 0.0
    %446 = vmatpush1.msra.mxu0 0.0
    %447 = vmatprep.subr.mxu0 0.0
    %448 = vmatpush1.msra.mxu0 0.0
    %449 = vmatprep.subr.mxu0 0.0
    %450 = vmatpush1.msra.mxu0 0.0
    %451 = vmatprep.subr.mxu0 0.0
    %452 = vmatpush1.msra.mxu0 0.0
    %453 = vmatprep.mubr.f32.mxu0 0.0
    %454 = vmatmul.mubr.f32.gmra.mrb[0].mxu0 %v342
    %v455 = vpop.f32.mrb[0].mxu0
    %v456 = vadd.f32 %v340, %v455
    %v457 = vpop.f32.mrb[0].mxu0
    %458 = vmatprep.mubr.f32.mxu0 0.0
    %459 = vmatmul.mubr.f32.gmra.mrb[0].mxu0 %v345
    %v460 = vpop.f32.mrb[0].mxu0
    %v461 = vadd.f32 %v340, %v460
    %v462 = vpop.f32.mrb[0].mxu0
    %463 = vmatprep.mubr.f32.mxu0 0.0
    %464 = vmatmul.mubr.f32.gmra.mrb[0].mxu0 %v348
    %v465 = vpop.f32.mrb[0].mxu0
    %v466 = vadd.f32 %v340, %v465
    %v467 = vpop.f32.mrb[0].mxu0
    %468 = vmatprep.mubr.f32.mxu0 0.0
    %469 = vmatmul.mubr.f32.gmra.mrb[0].mxu0 %v351
    %v470 = vpop.f32.mrb[0].mxu0
    %v471 = vadd.f32 %v340, %v470
    %v472 = vpop.f32.mrb[0].mxu0
    %473 = vmatprep.mubr.f32.mxu0 0.0
    %474 = vmatmul.mubr.f32.gmra.mrb[0].mxu0 %v354
    %v475 = vpop.f32.mrb[0].mxu0
    %v476 = vadd.f32 %v340, %v475
    %v477 = vpop.f32.mrb[0].mxu0
    %478 = vmatprep.mubr.f32.mxu0 0.0
    %479 = vmatmul.mubr.f32.gmra.mrb[0].mxu0 %v357
    %v480 = vpop.f32.mrb[0].mxu0
    %v481 = vadd.f32 %v340, %v480
    %v482 = vpop.f32.mrb[0].mxu0
    %483 = vmatprep.mubr.f32.mxu0 0.0
    %484 = vmatmul.mubr.f32.gmra.mrb[0].mxu0 %v360
    %v485 = vpop.f32.mrb[0].mxu0
    %v486 = vadd.f32 %v340, %v485
    %v487 = vpop.f32.mrb[0].mxu0
    %488 = vmatprep.mubr.f32.mxu0 0.0
    %489 = vmatmul.mubr.f32.gmra.mrb[0].mxu0 %v363
    %v490 = vpop.f32.mrb[0].mxu0
    %v491 = vadd.f32 %v340, %v490
    %v492 = vpop.f32.mrb[0].mxu0
    %493 = vmatprep.mubr.f32.mxu0 0.0
    %494 = vmatmul.mubr.f32.gmra.mrb[0].mxu0 %v366
    %v495 = vpop.f32.mrb[0].mxu0
    %v496 = vadd.f32 %v340, %v495
    %v497 = vpop.f32.mrb[0].mxu0
    %498 = vmatprep.mubr.f32.mxu0 0.0
    %499 = vmatmul.mubr.f32.gmra.mrb[0].mxu0 %v369
    %v500 = vpop.f32.mrb[0].mxu0
    %v501 = vadd.f32 %v340, %v500
    %v502 = vpop.f32.mrb[0].mxu0
    %503 = vmatprep.mubr.f32.mxu0 0.0
    %504 = vmatmul.mubr.f32.gmra.mrb[0].mxu0 %v372
    %v505 = vpop.f32.mrb[0].mxu0
    %v506 = vadd.f32 %v340, %v505
    %v507 = vpop.f32.mrb[0].mxu0
    %508 = vmatprep.mubr.f32.mxu0 0.0
    %509 = vmatmul.mubr.f32.gmra.mrb[0].mxu0 %v375
    %v510 = vpop.f32.mrb[0].mxu0
    %v511 = vadd.f32 %v340, %v510
    %v512 = vpop.f32.mrb[0].mxu0
    %513 = vmatprep.mubr.f32.mxu0 0.0
    %514 = vmatmul.mubr.f32.gmra.mrb[0].mxu0 %v378
    %v515 = vpop.f32.mrb[0].mxu0
    %v516 = vadd.f32 %v340, %v515
    %v517 = vpop.f32.mrb[0].mxu0
    %518 = vmatprep.mubr.f32.mxu0 0.0
    %519 = vmatmul.mubr.f32.gmra.mrb[0].mxu0 %v381
    %v520 = vpop.f32.mrb[0].mxu0
    %v521 = vadd.f32 %v340, %v520
    %v522 = vpop.f32.mrb[0].mxu0
    %523 = vmatprep.mubr.f32.mxu0 0.0
    %524 = vmatmul.mubr.f32.gmra.mrb[0].mxu0 %v384
    %v525 = vpop.f32.mrb[0].mxu0
    %v526 = vadd.f32 %v340, %v525
    %v527 = vpop.f32.mrb[0].mxu0
    %528 = vmatprep.mubr.f32.mxu0 0.0
    %529 = vmatmul.mubr.f32.gmra.mrb[0].mxu0 %v387
    %v530 = vpop.f32.mrb[0].mxu0
    %v531 = vadd.f32 %v340, %v530
    %v532 = vpop.f32.mrb[0].mxu0
    %533 = vdwg.mxu0
    %v534 = vmax.f32 %v456, 0.0
    %v535 = vmax.f32 %v461, 0.0
    %v536 = vmax.f32 %v466, 0.0
    %v537 = vmax.f32 %v471, 0.0
    %v538 = vmax.f32 %v476, 0.0
    %v539 = vmax.f32 %v481, 0.0
    %v540 = vmax.f32 %v486, 0.0
    %v541 = vmax.f32 %v491, 0.0
    %v542 = vmax.f32 %v496, 0.0
    %v543 = vmax.f32 %v501, 0.0
    %v544 = vmax.f32 %v506, 0.0
    %v545 = vmax.f32 %v511, 0.0
    %v546 = vmax.f32 %v516, 0.0
    %v547 = vmax.f32 %v521, 0.0
    %v548 = vmax.f32 %v526, 0.0
    %v549 = vmax.f32 %v531, 0.0
    %s550 = scalar_lea.vmem %s3, 32
    %v551 = vld [vmem:[%s550] sm:$0xff]
    %v552 = vld [vmem:[%s550 + $0x8] sm:$0xff]
    %v553 = vld [vmem:[%s550 + $0x10] sm:$0xff]
    %v554 = vld [vmem:[%s550 + $0x18] sm:$0xff]
    %v555 = vld [vmem:[%s4 + $0x1] sm:$0x1]
    %v556 = vlaneseq
    %v557 = vshrl.u32 %v556, 7
    %v558 = vsub.s32 0, %v557
    %v559 = vrot.slane %v555, %v558
    %v561 = vsel %vm82, %v534, 0
    %v564 = vsel %vm82, %v535, 0
    %v567 = vsel %vm82, %v536, 0
    %v570 = vsel %vm82, %v537, 0
    %v573 = vsel %vm82, %v538, 0
    %v576 = vsel %vm82, %v539, 0
    %v579 = vsel %vm82, %v540, 0
    %v582 = vsel %vm82, %v541, 0
    %v585 = vsel %vm82, %v542, 0
    %v588 = vsel %vm82, %v543, 0
    %v591 = vsel %vm82, %v544, 0
    %v594 = vsel %vm82, %v545, 0
    %v597 = vsel %vm82, %v546, 0
    %v600 = vsel %vm82, %v547, 0
    %v603 = vsel %vm82, %v548, 0
    %v606 = vsel %vm82, %v549, 0
    %608 = vmatprep.subr.mxu0 0.0
    %609 = vmatpush1.msra.mxu0 %v551
    %610 = vmatprep.subr.mxu0 0.0
    %611 = vmatpush1.msra.mxu0 %v552
    %612 = vmatprep.subr.mxu0 0.0
    %613 = vmatpush1.msra.mxu0 %v553
    %614 = vmatprep.subr.mxu0 0.0
    %615 = vmatpush1.msra.mxu0 %v554
    %616 = vmatprep.subr.mxu0 0.0
    %617 = vmatpush1.msra.mxu0 0.0
    %618 = vmatprep.subr.mxu0 0.0
    %619 = vmatpush1.msra.mxu0 0.0
    %620 = vmatprep.subr.mxu0 0.0
    %621 = vmatpush1.msra.mxu0 0.0
    %622 = vmatprep.subr.mxu0 0.0
    %623 = vmatpush1.msra.mxu0 0.0
    %624 = vmatprep.subr.mxu0 0.0
    %625 = vmatpush1.msra.mxu0 0.0
    %626 = vmatprep.subr.mxu0 0.0
    %627 = vmatpush1.msra.mxu0 0.0
    %628 = vmatprep.subr.mxu0 0.0
    %629 = vmatpush1.msra.mxu0 0.0
    %630 = vmatprep.subr.mxu0 0.0
    %631 = vmatpush1.msra.mxu0 0.0
    %632 = vmatprep.subr.mxu0 0.0
    %633 = vmatpush1.msra.mxu0 0.0
    %634 = vmatprep.subr.mxu0 0.0
    %635 = vmatpush1.msra.mxu0 0.0
    %636 = vmatprep.subr.mxu0 0.0
    %637 = vmatpush1.msra.mxu0 0.0
    %638 = vmatprep.subr.mxu0 0.0
    %639 = vmatpush1.msra.mxu0 0.0
    %640 = vmatprep.subr.mxu0 0.0
    %641 = vmatpush1.msra.mxu0 0.0
    %642 = vmatprep.subr.mxu0 0.0
    %643 = vmatpush1.msra.mxu0 0.0
    %644 = vmatprep.subr.mxu0 0.0
    %645 = vmatpush1.msra.mxu0 0.0
    %646 = vmatprep.subr.mxu0 0.0
    %647 = vmatpush1.msra.mxu0 0.0
    %648 = vmatprep.subr.mxu0 0.0
    %649 = vmatpush1.msra.mxu0 0.0
    %650 = vmatprep.subr.mxu0 0.0
    %651 = vmatpush1.msra.mxu0 0.0
    %652 = vmatprep.subr.mxu0 0.0
    %653 = vmatpush1.msra.mxu0 0.0
    %654 = vmatprep.subr.mxu0 0.0
    %655 = vmatpush1.msra.mxu0 0.0
    %656 = vmatprep.subr.mxu0 0.0
    %657 = vmatpush1.msra.mxu0 0.0
    %658 = vmatprep.subr.mxu0 0.0
    %659 = vmatpush1.msra.mxu0 0.0
    %660 = vmatprep.subr.mxu0 0.0
    %661 = vmatpush1.msra.mxu0 0.0
    %662 = vmatprep.subr.mxu0 0.0
    %663 = vmatpush1.msra.mxu0 0.0
    %664 = vmatprep.subr.mxu0 0.0
    %665 = vmatpush1.msra.mxu0 0.0
    %666 = vmatprep.subr.mxu0 0.0
    %667 = vmatpush1.msra.mxu0 0.0
    %668 = vmatprep.subr.mxu0 0.0
    %669 = vmatpush1.msra.mxu0 0.0
    %670 = vmatprep.subr.mxu0 0.0
    %671 = vmatpush1.msra.mxu0 0.0
    %672 = vmatprep.mubr.f32.mxu0 0.0
    %673 = vmatmul.mubr.f32.gmra.mrb[0].mxu0 %v561
    %v674 = vpop.f32.mrb[0].mxu0
    %v675 = vadd.f32 %v559, %v674
    %v676 = vpop.f32.mrb[0].mxu0
    %677 = vmatprep.mubr.f32.mxu0 0.0
    %678 = vmatmul.mubr.f32.gmra.mrb[0].mxu0 %v564
    %v679 = vpop.f32.mrb[0].mxu0
    %v680 = vadd.f32 %v559, %v679
    %v681 = vpop.f32.mrb[0].mxu0
    %682 = vmatprep.mubr.f32.mxu0 0.0
    %683 = vmatmul.mubr.f32.gmra.mrb[0].mxu0 %v567
    %v684 = vpop.f32.mrb[0].mxu0
    %v685 = vadd.f32 %v559, %v684
    %v686 = vpop.f32.mrb[0].mxu0
    %687 = vmatprep.mubr.f32.mxu0 0.0
    %688 = vmatmul.mubr.f32.gmra.mrb[0].mxu0 %v570
    %v689 = vpop.f32.mrb[0].mxu0
    %v690 = vadd.f32 %v559, %v689
    %v691 = vpop.f32.mrb[0].mxu0
    %692 = vmatprep.mubr.f32.mxu0 0.0
    %693 = vmatmul.mubr.f32.gmra.mrb[0].mxu0 %v573
    %v694 = vpop.f32.mrb[0].mxu0
    %v695 = vadd.f32 %v559, %v694
    %v696 = vpop.f32.mrb[0].mxu0
    %697 = vmatprep.mubr.f32.mxu0 0.0
    %698 = vmatmul.mubr.f32.gmra.mrb[0].mxu0 %v576
    %v699 = vpop.f32.mrb[0].mxu0
    %v700 = vadd.f32 %v559, %v699
    %v701 = vpop.f32.mrb[0].mxu0
    %702 = vmatprep.mubr.f32.mxu0 0.0
    %703 = vmatmul.mubr.f32.gmra.mrb[0].mxu0 %v579
    %v704 = vpop.f32.mrb[0].mxu0
    %v705 = vadd.f32 %v559, %v704
    %v706 = vpop.f32.mrb[0].mxu0
    %707 = vmatprep.mubr.f32.mxu0 0.0
    %708 = vmatmul.mubr.f32.gmra.mrb[0].mxu0 %v582
    %v709 = vpop.f32.mrb[0].mxu0
    %v710 = vadd.f32 %v559, %v709
    %v711 = vpop.f32.mrb[0].mxu0
    %712 = vmatprep.mubr.f32.mxu0 0.0
    %713 = vmatmul.mubr.f32.gmra.mrb[0].mxu0 %v585
    %v714 = vpop.f32.mrb[0].mxu0
    %v715 = vadd.f32 %v559, %v714
    %v716 = vpop.f32.mrb[0].mxu0
    %717 = vmatprep.mubr.f32.mxu0 0.0
    %718 = vmatmul.mubr.f32.gmra.mrb[0].mxu0 %v588
    %v719 = vpop.f32.mrb[0].mxu0
    %v720 = vadd.f32 %v559, %v719
    %v721 = vpop.f32.mrb[0].mxu0
    %722 = vmatprep.mubr.f32.mxu0 0.0
    %723 = vmatmul.mubr.f32.gmra.mrb[0].mxu0 %v591
    %v724 = vpop.f32.mrb[0].mxu0
    %v725 = vadd.f32 %v559, %v724
    %v726 = vpop.f32.mrb[0].mxu0
    %727 = vmatprep.mubr.f32.mxu0 0.0
    %728 = vmatmul.mubr.f32.gmra.mrb[0].mxu0 %v594
    %v729 = vpop.f32.mrb[0].mxu0
    %v730 = vadd.f32 %v559, %v729
    %v731 = vpop.f32.mrb[0].mxu0
    %732 = vmatprep.mubr.f32.mxu0 0.0
    %733 = vmatmul.mubr.f32.gmra.mrb[0].mxu0 %v597
    %v734 = vpop.f32.mrb[0].mxu0
    %v735 = vadd.f32 %v559, %v734
    %v736 = vpop.f32.mrb[0].mxu0
    %737 = vmatprep.mubr.f32.mxu0 0.0
    %738 = vmatmul.mubr.f32.gmra.mrb[0].mxu0 %v600
    %v739 = vpop.f32.mrb[0].mxu0
    %v740 = vadd.f32 %v559, %v739
    %v741 = vpop.f32.mrb[0].mxu0
    %742 = vmatprep.mubr.f32.mxu0 0.0
    %743 = vmatmul.mubr.f32.gmra.mrb[0].mxu0 %v603
    %v744 = vpop.f32.mrb[0].mxu0
    %v745 = vadd.f32 %v559, %v744
    %v746 = vpop.f32.mrb[0].mxu0
    %747 = vmatprep.mubr.f32.mxu0 0.0
    %748 = vmatmul.mubr.f32.gmra.mrb[0].mxu0 %v606
    %v749 = vpop.f32.mrb[0].mxu0
    %v750 = vadd.f32 %v559, %v749
    %v751 = vpop.f32.mrb[0].mxu0
    %752 = vdwg.mxu0
    %s753 = scalar_lea.vmem %s7, 2
    %v754 = vld [vmem:[%s753] sm:$0x3]
    %v755 = vsel %vm82, %v675, 0.0
    %756 = vadd.xlane.f32.xlu0 %v755
    %v757 = vpop.xlane.xlu0 %756
    %v758 = vsel %vm82, %v680, 0.0
    %759 = vadd.xlane.f32.xlu0 %v758
    %v760 = vpop.xlane.xlu0 %759
    %v761 = vsel %vm82, %v685, 0.0
    %762 = vadd.xlane.f32.xlu0 %v761
    %v763 = vpop.xlane.xlu0 %762
    %v764 = vsel %vm82, %v690, 0.0
    %765 = vadd.xlane.f32.xlu0 %v764
    %v766 = vpop.xlane.xlu0 %765
    %v767 = vsel %vm82, %v695, 0.0
    %768 = vadd.xlane.f32.xlu0 %v767
    %v769 = vpop.xlane.xlu0 %768
    %v770 = vsel %vm82, %v700, 0.0
    %771 = vadd.xlane.f32.xlu0 %v770
    %v772 = vpop.xlane.xlu0 %771
    %v773 = vsel %vm82, %v705, 0.0
    %774 = vadd.xlane.f32.xlu0 %v773
    %v775 = vpop.xlane.xlu0 %774
    %v776 = vsel %vm82, %v710, 0.0
    %777 = vadd.xlane.f32.xlu0 %v776
    %v778 = vpop.xlane.xlu0 %777
    %v779 = vsel %vm82, %v715, 0.0
    %780 = vadd.xlane.f32.xlu0 %v779
    %v781 = vpop.xlane.xlu0 %780
    %v782 = vsel %vm82, %v720, 0.0
    %783 = vadd.xlane.f32.xlu0 %v782
    %v784 = vpop.xlane.xlu0 %783
    %v785 = vsel %vm82, %v725, 0.0
    %786 = vadd.xlane.f32.xlu0 %v785
    %v787 = vpop.xlane.xlu0 %786
    %v788 = vsel %vm82, %v730, 0.0
    %789 = vadd.xlane.f32.xlu0 %v788
    %v790 = vpop.xlane.xlu0 %789
    %v791 = vsel %vm82, %v735, 0.0
    %792 = vadd.xlane.f32.xlu0 %v791
    %v793 = vpop.xlane.xlu0 %792
    %v794 = vsel %vm82, %v740, 0.0
    %795 = vadd.xlane.f32.xlu0 %v794
    %v796 = vpop.xlane.xlu0 %795
    %v797 = vsel %vm82, %v745, 0.0
    %798 = vadd.xlane.f32.xlu0 %v797
    %v799 = vpop.xlane.xlu0 %798
    %v800 = vsel %vm82, %v750, 0.0
    %801 = vadd.xlane.f32.xlu0 %v800
    %v802 = vpop.xlane.xlu0 %801
    %v803 = vmul.f32 %v757, %v131
    %v804 = vmul.f32 %v760, %v131
    %v805 = vmul.f32 %v763, %v131
    %v806 = vmul.f32 %v766, %v131
    %v807 = vmul.f32 %v769, %v131
    %v808 = vmul.f32 %v772, %v131
    %v809 = vmul.f32 %v775, %v131
    %v810 = vmul.f32 %v778, %v131
    %v811 = vmul.f32 %v781, %v131
    %v812 = vmul.f32 %v784, %v131
    %v813 = vmul.f32 %v787, %v131
    %v814 = vmul.f32 %v790, %v131
    %v815 = vmul.f32 %v793, %v131
    %v816 = vmul.f32 %v796, %v131
    %v817 = vmul.f32 %v799, %v131
    %v818 = vmul.f32 %v802, %v131
    %v819 = vsub.f32 %v675, %v803
    %v820 = vsub.f32 %v680, %v804
    %v821 = vsub.f32 %v685, %v805
    %v822 = vsub.f32 %v690, %v806
    %v823 = vsub.f32 %v695, %v807
    %v824 = vsub.f32 %v700, %v808
    %v825 = vsub.f32 %v705, %v809
    %v826 = vsub.f32 %v710, %v810
    %v827 = vsub.f32 %v715, %v811
    %v828 = vsub.f32 %v720, %v812
    %v829 = vsub.f32 %v725, %v813
    %v830 = vsub.f32 %v730, %v814
    %v831 = vsub.f32 %v735, %v815
    %v832 = vsub.f32 %v740, %v816
    %v833 = vsub.f32 %v745, %v817
    %v834 = vsub.f32 %v750, %v818
    %v835 = vmul.f32 %v819, %v819
    %v836 = vmul.f32 %v820, %v820
    %v837 = vmul.f32 %v821, %v821
    %v838 = vmul.f32 %v822, %v822
    %v839 = vmul.f32 %v823, %v823
    %v840 = vmul.f32 %v824, %v824
    %v841 = vmul.f32 %v825, %v825
    %v842 = vmul.f32 %v826, %v826
    %v843 = vmul.f32 %v827, %v827
    %v844 = vmul.f32 %v828, %v828
    %v845 = vmul.f32 %v829, %v829
    %v846 = vmul.f32 %v830, %v830
    %v847 = vmul.f32 %v831, %v831
    %v848 = vmul.f32 %v832, %v832
    %v849 = vmul.f32 %v833, %v833
    %v850 = vmul.f32 %v834, %v834
    %v851 = vsel %vm82, %v835, 0.0
    %852 = vadd.xlane.f32.xlu0 %v851
    %v853 = vpop.xlane.xlu0 %852
    %v854 = vsel %vm82, %v836, 0.0
    %855 = vadd.xlane.f32.xlu0 %v854
    %v856 = vpop.xlane.xlu0 %855
    %v857 = vsel %vm82, %v837, 0.0
    %858 = vadd.xlane.f32.xlu0 %v857
    %v859 = vpop.xlane.xlu0 %858
    %v860 = vsel %vm82, %v838, 0.0
    %861 = vadd.xlane.f32.xlu0 %v860
    %v862 = vpop.xlane.xlu0 %861
    %v863 = vsel %vm82, %v839, 0.0
    %864 = vadd.xlane.f32.xlu0 %v863
    %v865 = vpop.xlane.xlu0 %864
    %v866 = vsel %vm82, %v840, 0.0
    %867 = vadd.xlane.f32.xlu0 %v866
    %v868 = vpop.xlane.xlu0 %867
    %v869 = vsel %vm82, %v841, 0.0
    %870 = vadd.xlane.f32.xlu0 %v869
    %v871 = vpop.xlane.xlu0 %870
    %v872 = vsel %vm82, %v842, 0.0
    %873 = vadd.xlane.f32.xlu0 %v872
    %v874 = vpop.xlane.xlu0 %873
    %v875 = vsel %vm82, %v843, 0.0
    %876 = vadd.xlane.f32.xlu0 %v875
    %v877 = vpop.xlane.xlu0 %876
    %v878 = vsel %vm82, %v844, 0.0
    %879 = vadd.xlane.f32.xlu0 %v878
    %v880 = vpop.xlane.xlu0 %879
    %v881 = vsel %vm82, %v845, 0.0
    %882 = vadd.xlane.f32.xlu0 %v881
    %v883 = vpop.xlane.xlu0 %882
    %v884 = vsel %vm82, %v846, 0.0
    %885 = vadd.xlane.f32.xlu0 %v884
    %v886 = vpop.xlane.xlu0 %885
    %v887 = vsel %vm82, %v847, 0.0
    %888 = vadd.xlane.f32.xlu0 %v887
    %v889 = vpop.xlane.xlu0 %888
    %v890 = vsel %vm82, %v848, 0.0
    %891 = vadd.xlane.f32.xlu0 %v890
    %v892 = vpop.xlane.xlu0 %891
    %v893 = vsel %vm82, %v849, 0.0
    %894 = vadd.xlane.f32.xlu0 %v893
    %v895 = vpop.xlane.xlu0 %894
    %v896 = vsel %vm82, %v850, 0.0
    %897 = vadd.xlane.f32.xlu0 %v896
    %v898 = vpop.xlane.xlu0 %897
    %v899 = vmul.f32 %v853, %v131
    %v900 = vmul.f32 %v856, %v131
    %v901 = vmul.f32 %v859, %v131
    %v902 = vmul.f32 %v862, %v131
    %v903 = vmul.f32 %v865, %v131
    %v904 = vmul.f32 %v868, %v131
    %v905 = vmul.f32 %v871, %v131
    %v906 = vmul.f32 %v874, %v131
    %v907 = vmul.f32 %v877, %v131
    %v908 = vmul.f32 %v880, %v131
    %v909 = vmul.f32 %v883, %v131
    %v910 = vmul.f32 %v886, %v131
    %v911 = vmul.f32 %v889, %v131
    %v912 = vmul.f32 %v892, %v131
    %v913 = vmul.f32 %v895, %v131
    %v914 = vmul.f32 %v898, %v131
    %v915 = vadd.f32 %v899, 1e-05
    %v916 = vadd.f32 %v900, 1e-05
    %v917 = vadd.f32 %v901, 1e-05
    %v918 = vadd.f32 %v902, 1e-05
    %v919 = vadd.f32 %v903, 1e-05
    %v920 = vadd.f32 %v904, 1e-05
    %v921 = vadd.f32 %v905, 1e-05
    %v922 = vadd.f32 %v906, 1e-05
    %v923 = vadd.f32 %v907, 1e-05
    %v924 = vadd.f32 %v908, 1e-05
    %v925 = vadd.f32 %v909, 1e-05
    %v926 = vadd.f32 %v910, 1e-05
    %v927 = vadd.f32 %v911, 1e-05
    %v928 = vadd.f32 %v912, 1e-05
    %v929 = vadd.f32 %v913, 1e-05
    %v930 = vadd.f32 %v914, 1e-05
    %v931 = vrsqrt.pop %v915
    %v932 = vrsqrt.pop %v916
    %v933 = vrsqrt.pop %v917
    %v934 = vrsqrt.pop %v918
    %v935 = vrsqrt.pop %v919
    %v936 = vrsqrt.pop %v920
    %v937 = vrsqrt.pop %v921
    %v938 = vrsqrt.pop %v922
    %v939 = vrsqrt.pop %v923
    %v940 = vrsqrt.pop %v924
    %v941 = vrsqrt.pop %v925
    %v942 = vrsqrt.pop %v926
    %v943 = vrsqrt.pop %v927
    %v944 = vrsqrt.pop %v928
    %v945 = vrsqrt.pop %v929
    %v946 = vrsqrt.pop %v930
    %v947 = vmul.f32 %v819, %v931
    %v948 = vmul.f32 %v820, %v932
    %v949 = vmul.f32 %v821, %v933
    %v950 = vmul.f32 %v822, %v934
    %v951 = vmul.f32 %v823, %v935
    %v952 = vmul.f32 %v824, %v936
    %v953 = vmul.f32 %v825, %v937
    %v954 = vmul.f32 %v826, %v938
    %v955 = vmul.f32 %v827, %v939
    %v956 = vmul.f32 %v828, %v940
    %v957 = vmul.f32 %v829, %v941
    %v958 = vmul.f32 %v830, %v942
    %v959 = vmul.f32 %v831, %v943
    %v960 = vmul.f32 %v832, %v944
    %v961 = vmul.f32 %v833, %v945
    %v962 = vmul.f32 %v834, %v946
    %v963 = vlaneseq
    %v964 = vshrl.u32 %v963, 7
    %v965 = vsub.s32 0, %v964
    %v966 = vrot.slane %v754, %v965
    %v967 = vmul.f32 %v947, %v966
    %v968 = vmul.f32 %v948, %v966
    %v969 = vmul.f32 %v949, %v966
    %v970 = vmul.f32 %v950, %v966
    %v971 = vmul.f32 %v951, %v966
    %v972 = vmul.f32 %v952, %v966
    %v973 = vmul.f32 %v953, %v966
    %v974 = vmul.f32 %v954, %v966
    %v975 = vmul.f32 %v955, %v966
    %v976 = vmul.f32 %v956, %v966
    %v977 = vmul.f32 %v957, %v966
    %v978 = vmul.f32 %v958, %v966
    %v979 = vmul.f32 %v959, %v966
    %v980 = vmul.f32 %v960, %v966
    %v981 = vmul.f32 %v961, %v966
    %v982 = vmul.f32 %v962, %v966
    %v983 = vlaneseq
    %v984 = vshrl.u32 %v983, 7
    %v985 = vsub.s32 1, %v984
    %v986 = vrot.slane %v754, %v985
    %v987 = vadd.f32 %v967, %v986
    %v988 = vadd.f32 %v968, %v986
    %v989 = vadd.f32 %v969, %v986
    %v990 = vadd.f32 %v970, %v986
    %v991 = vadd.f32 %v971, %v986
    %v992 = vadd.f32 %v972, %v986
    %v993 = vadd.f32 %v973, %v986
    %v994 = vadd.f32 %v974, %v986
    %v995 = vadd.f32 %v975, %v986
    %v996 = vadd.f32 %v976, %v986
    %v997 = vadd.f32 %v977, %v986
    %v998 = vadd.f32 %v978, %v986
    %v999 = vadd.f32 %v979, %v986
    %v1000 = vadd.f32 %v980, %v986
    %v1001 = vadd.f32 %v981, %v986
    %v1002 = vadd.f32 %v982, %v986
    %v1003 = vld [vmem:[%s5] sm:$0xff]
    %v1004 = vld [vmem:[%s5 + $0x8] sm:$0xff]
    %v1005 = vld [vmem:[%s5 + $0x10] sm:$0xff]
    %v1006 = vld [vmem:[%s5 + $0x18] sm:$0xff]
    %v1007 = vld [vmem:[%s6] sm:$0x1]
    %v1009 = vlaneseq
    %v1010 = vshrl.u32 %v1009, 7
    %v1011 = vsub.s32 0, %v1010
    %v1012 = vrot.slane %v1007, %v1011
    %v1015 = vsel %vm82, %v987, 0
    %v1018 = vsel %vm82, %v988, 0
    %v1021 = vsel %vm82, %v989, 0
    %v1024 = vsel %vm82, %v990, 0
    %v1027 = vsel %vm82, %v991, 0
    %v1030 = vsel %vm82, %v992, 0
    %v1033 = vsel %vm82, %v993, 0
    %v1036 = vsel %vm82, %v994, 0
    %v1039 = vsel %vm82, %v995, 0
    %v1042 = vsel %vm82, %v996, 0
    %v1045 = vsel %vm82, %v997, 0
    %v1048 = vsel %vm82, %v998, 0
    %v1051 = vsel %vm82, %v999, 0
    %v1054 = vsel %vm82, %v1000, 0
    %v1057 = vsel %vm82, %v1001, 0
    %v1060 = vsel %vm82, %v1002, 0
    %1062 = vmatprep.subr.mxu0 0.0
    %1063 = vmatpush1.msra.mxu0 %v1003
    %1064 = vmatprep.subr.mxu0 0.0
    %1065 = vmatpush1.msra.mxu0 %v1004
    %1066 = vmatprep.subr.mxu0 0.0
    %1067 = vmatpush1.msra.mxu0 %v1005
    %1068 = vmatprep.subr.mxu0 0.0
    %1069 = vmatpush1.msra.mxu0 %v1006
    %1070 = vmatprep.subr.mxu0 0.0
    %1071 = vmatpush1.msra.mxu0 0.0
    %1072 = vmatprep.subr.mxu0 0.0
    %1073 = vmatpush1.msra.mxu0 0.0
    %1074 = vmatprep.subr.mxu0 0.0
    %1075 = vmatpush1.msra.mxu0 0.0
    %1076 = vmatprep.subr.mxu0 0.0
    %1077 = vmatpush1.msra.mxu0 0.0
    %1078 = vmatprep.subr.mxu0 0.0
    %1079 = vmatpush1.msra.mxu0 0.0
    %1080 = vmatprep.subr.mxu0 0.0
    %1081 = vmatpush1.msra.mxu0 0.0
    %1082 = vmatprep.subr.mxu0 0.0
    %1083 = vmatpush1.msra.mxu0 0.0
    %1084 = vmatprep.subr.mxu0 0.0
    %1085 = vmatpush1.msra.mxu0 0.0
    %1086 = vmatprep.subr.mxu0 0.0
    %1087 = vmatpush1.msra.mxu0 0.0
    %1088 = vmatprep.subr.mxu0 0.0
    %1089 = vmatpush1.msra.mxu0 0.0
    %1090 = vmatprep.subr.mxu0 0.0
    %1091 = vmatpush1.msra.mxu0 0.0
    %1092 = vmatprep.subr.mxu0 0.0
    %1093 = vmatpush1.msra.mxu0 0.0
    %1094 = vmatprep.subr.mxu0 0.0
    %1095 = vmatpush1.msra.mxu0 0.0
    %1096 = vmatprep.subr.mxu0 0.0
    %1097 = vmatpush1.msra.mxu0 0.0
    %1098 = vmatprep.subr.mxu0 0.0
    %1099 = vmatpush1.msra.mxu0 0.0
    %1100 = vmatprep.subr.mxu0 0.0
    %1101 = vmatpush1.msra.mxu0 0.0
    %1102 = vmatprep.subr.mxu0 0.0
    %1103 = vmatpush1.msra.mxu0 0.0
    %1104 = vmatprep.subr.mxu0 0.0
    %1105 = vmatpush1.msra.mxu0 0.0
    %1106 = vmatprep.subr.mxu0 0.0
    %1107 = vmatpush1.msra.mxu0 0.0
    %1108 = vmatprep.subr.mxu0 0.0
    %1109 = vmatpush1.msra.mxu0 0.0
    %1110 = vmatprep.subr.mxu0 0.0
    %1111 = vmatpush1.msra.mxu0 0.0
    %1112 = vmatprep.subr.mxu0 0.0
    %1113 = vmatpush1.msra.mxu0 0.0
    %1114 = vmatprep.subr.mxu0 0.0
    %1115 = vmatpush1.msra.mxu0 0.0
    %1116 = vmatprep.subr.mxu0 0.0
    %1117 = vmatpush1.msra.mxu0 0.0
    %1118 = vmatprep.subr.mxu0 0.0
    %1119 = vmatpush1.msra.mxu0 0.0
    %1120 = vmatprep.subr.mxu0 0.0
    %1121 = vmatpush1.msra.mxu0 0.0
    %1122 = vmatprep.subr.mxu0 0.0
    %1123 = vmatpush1.msra.mxu0 0.0
    %1124 = vmatprep.subr.mxu0 0.0
    %1125 = vmatpush1.msra.mxu0 0.0
    %1126 = vmatprep.mubr.f32.mxu0 0.0
    %1127 = vmatmul.mubr.f32.gmra.mrb[0].mxu0 %v1015
    %v1128 = vpop.f32.mrb[0].mxu0
    %v1129 = vadd.f32 %v1012, %v1128
    %v1130 = vpop.f32.mrb[0].mxu0
    %1131 = vmatprep.mubr.f32.mxu0 0.0
    %1132 = vmatmul.mubr.f32.gmra.mrb[0].mxu0 %v1018
    %v1133 = vpop.f32.mrb[0].mxu0
    %v1134 = vadd.f32 %v1012, %v1133
    %v1135 = vpop.f32.mrb[0].mxu0
    %1136 = vmatprep.mubr.f32.mxu0 0.0
    %1137 = vmatmul.mubr.f32.gmra.mrb[0].mxu0 %v1021
    %v1138 = vpop.f32.mrb[0].mxu0
    %v1139 = vadd.f32 %v1012, %v1138
    %v1140 = vpop.f32.mrb[0].mxu0
    %1141 = vmatprep.mubr.f32.mxu0 0.0
    %1142 = vmatmul.mubr.f32.gmra.mrb[0].mxu0 %v1024
    %v1143 = vpop.f32.mrb[0].mxu0
    %v1144 = vadd.f32 %v1012, %v1143
    %v1145 = vpop.f32.mrb[0].mxu0
    %1146 = vmatprep.mubr.f32.mxu0 0.0
    %1147 = vmatmul.mubr.f32.gmra.mrb[0].mxu0 %v1027
    %v1148 = vpop.f32.mrb[0].mxu0
    %v1149 = vadd.f32 %v1012, %v1148
    %v1150 = vpop.f32.mrb[0].mxu0
    %1151 = vmatprep.mubr.f32.mxu0 0.0
    %1152 = vmatmul.mubr.f32.gmra.mrb[0].mxu0 %v1030
    %v1153 = vpop.f32.mrb[0].mxu0
    %v1154 = vadd.f32 %v1012, %v1153
    %v1155 = vpop.f32.mrb[0].mxu0
    %1156 = vmatprep.mubr.f32.mxu0 0.0
    %1157 = vmatmul.mubr.f32.gmra.mrb[0].mxu0 %v1033
    %v1158 = vpop.f32.mrb[0].mxu0
    %v1159 = vadd.f32 %v1012, %v1158
    %v1160 = vpop.f32.mrb[0].mxu0
    %1161 = vmatprep.mubr.f32.mxu0 0.0
    %1162 = vmatmul.mubr.f32.gmra.mrb[0].mxu0 %v1036
    %v1163 = vpop.f32.mrb[0].mxu0
    %v1164 = vadd.f32 %v1012, %v1163
    %v1165 = vpop.f32.mrb[0].mxu0
    %1166 = vmatprep.mubr.f32.mxu0 0.0
    %1167 = vmatmul.mubr.f32.gmra.mrb[0].mxu0 %v1039
    %v1168 = vpop.f32.mrb[0].mxu0
    %v1169 = vadd.f32 %v1012, %v1168
    %v1170 = vpop.f32.mrb[0].mxu0
    %1171 = vmatprep.mubr.f32.mxu0 0.0
    %1172 = vmatmul.mubr.f32.gmra.mrb[0].mxu0 %v1042
    %v1173 = vpop.f32.mrb[0].mxu0
    %v1174 = vadd.f32 %v1012, %v1173
    %v1175 = vpop.f32.mrb[0].mxu0
    %1176 = vmatprep.mubr.f32.mxu0 0.0
    %1177 = vmatmul.mubr.f32.gmra.mrb[0].mxu0 %v1045
    %v1178 = vpop.f32.mrb[0].mxu0
    %v1179 = vadd.f32 %v1012, %v1178
    %v1180 = vpop.f32.mrb[0].mxu0
    %1181 = vmatprep.mubr.f32.mxu0 0.0
    %1182 = vmatmul.mubr.f32.gmra.mrb[0].mxu0 %v1048
    %v1183 = vpop.f32.mrb[0].mxu0
    %v1184 = vadd.f32 %v1012, %v1183
    %v1185 = vpop.f32.mrb[0].mxu0
    %1186 = vmatprep.mubr.f32.mxu0 0.0
    %1187 = vmatmul.mubr.f32.gmra.mrb[0].mxu0 %v1051
    %v1188 = vpop.f32.mrb[0].mxu0
    %v1189 = vadd.f32 %v1012, %v1188
    %v1190 = vpop.f32.mrb[0].mxu0
    %1191 = vmatprep.mubr.f32.mxu0 0.0
    %1192 = vmatmul.mubr.f32.gmra.mrb[0].mxu0 %v1054
    %v1193 = vpop.f32.mrb[0].mxu0
    %v1194 = vadd.f32 %v1012, %v1193
    %v1195 = vpop.f32.mrb[0].mxu0
    %1196 = vmatprep.mubr.f32.mxu0 0.0
    %1197 = vmatmul.mubr.f32.gmra.mrb[0].mxu0 %v1057
    %v1198 = vpop.f32.mrb[0].mxu0
    %v1199 = vadd.f32 %v1012, %v1198
    %v1200 = vpop.f32.mrb[0].mxu0
    %1201 = vmatprep.mubr.f32.mxu0 0.0
    %1202 = vmatmul.mubr.f32.gmra.mrb[0].mxu0 %v1060
    %v1203 = vpop.f32.mrb[0].mxu0
    %v1204 = vadd.f32 %v1012, %v1203
    %v1205 = vpop.f32.mrb[0].mxu0
    %1206 = vdwg.mxu0
    %v1207 = vld [vmem:[%s2] sm:$0xff]
    %s1208 = scalar_lea.vmem %s7, 4
    %v1209 = vld [vmem:[%s1208] sm:$0x3]
    %v1210 = vsel %vm82, %v1207, 0.0
    %1211 = vadd.xlane.f32.xlu0 %v1210
    %v1212 = vpop.xlane.xlu0 %1211
    %v1213 = vmul.f32 %v1212, %v131
    %v1214 = vsub.f32 %v1207, %v1213
    %v1215 = vmul.f32 %v1214, %v1214
    %v1216 = vsel %vm82, %v1215, 0.0
    %1217 = vadd.xlane.f32.xlu0 %v1216
    %v1218 = vpop.xlane.xlu0 %1217
    %v1219 = vmul.f32 %v1218, %v131
    %v1220 = vadd.f32 %v1219, 1e-05
    %v1221 = vrsqrt.pop %v1220
    %v1222 = vmul.f32 %v1214, %v1221
    %v1223 = vlaneseq
    %v1224 = vshrl.u32 %v1223, 7
    %v1225 = vsub.s32 0, %v1224
    %v1226 = vrot.slane %v1209, %v1225
    %v1227 = vmul.f32 %v1222, %v1226
    %v1228 = vlaneseq
    %v1229 = vshrl.u32 %v1228, 7
    %v1230 = vsub.s32 1, %v1229
    %v1231 = vrot.slane %v1209, %v1230
    %v1232 = vadd.f32 %v1227, %v1231
    %s1233 = scalar_lea.vmem %s3, 64
    %v1234 = vld [vmem:[%s1233] sm:$0xff]
    %v1235 = vld [vmem:[%s1233 + $0x8] sm:$0xff]
    %v1236 = vld [vmem:[%s1233 + $0x10] sm:$0xff]
    %v1237 = vld [vmem:[%s1233 + $0x18] sm:$0xff]
    %v1238 = vld [vmem:[%s4 + $0x2] sm:$0x1]
    %v1239 = vlaneseq
    %v1240 = vshrl.u32 %v1239, 7
    %v1241 = vsub.s32 0, %v1240
    %v1242 = vrot.slane %v1238, %v1241
    %v1244 = vsel %vm82, %v1232, 0
    %1246 = vmatprep.subr.mxu0 0.0
    %1247 = vmatpush1.msra.mxu0 %v1234
    %1248 = vmatprep.subr.mxu0 0.0
    %1249 = vmatpush1.msra.mxu0 %v1235
    %1250 = vmatprep.subr.mxu0 0.0
    %1251 = vmatpush1.msra.mxu0 %v1236
    %1252 = vmatprep.subr.mxu0 0.0
    %1253 = vmatpush1.msra.mxu0 %v1237
    %1254 = vmatprep.subr.mxu0 0.0
    %1255 = vmatpush1.msra.mxu0 0.0
    %1256 = vmatprep.subr.mxu0 0.0
    %1257 = vmatpush1.msra.mxu0 0.0
    %1258 = vmatprep.subr.mxu0 0.0
    %1259 = vmatpush1.msra.mxu0 0.0
    %1260 = vmatprep.subr.mxu0 0.0
    %1261 = vmatpush1.msra.mxu0 0.0
    %1262 = vmatprep.subr.mxu0 0.0
    %1263 = vmatpush1.msra.mxu0 0.0
    %1264 = vmatprep.subr.mxu0 0.0
    %1265 = vmatpush1.msra.mxu0 0.0
    %1266 = vmatprep.subr.mxu0 0.0
    %1267 = vmatpush1.msra.mxu0 0.0
    %1268 = vmatprep.subr.mxu0 0.0
    %1269 = vmatpush1.msra.mxu0 0.0
    %1270 = vmatprep.subr.mxu0 0.0
    %1271 = vmatpush1.msra.mxu0 0.0
    %1272 = vmatprep.subr.mxu0 0.0
    %1273 = vmatpush1.msra.mxu0 0.0
    %1274 = vmatprep.subr.mxu0 0.0
    %1275 = vmatpush1.msra.mxu0 0.0
    %1276 = vmatprep.subr.mxu0 0.0
    %1277 = vmatpush1.msra.mxu0 0.0
    %1278 = vmatprep.subr.mxu0 0.0
    %1279 = vmatpush1.msra.mxu0 0.0
    %1280 = vmatprep.subr.mxu0 0.0
    %1281 = vmatpush1.msra.mxu0 0.0
    %1282 = vmatprep.subr.mxu0 0.0
    %1283 = vmatpush1.msra.mxu0 0.0
    %1284 = vmatprep.subr.mxu0 0.0
    %1285 = vmatpush1.msra.mxu0 0.0
    %1286 = vmatprep.subr.mxu0 0.0
    %1287 = vmatpush1.msra.mxu0 0.0
    %1288 = vmatprep.subr.mxu0 0.0
    %1289 = vmatpush1.msra.mxu0 0.0
    %1290 = vmatprep.subr.mxu0 0.0
    %1291 = vmatpush1.msra.mxu0 0.0
    %1292 = vmatprep.subr.mxu0 0.0
    %1293 = vmatpush1.msra.mxu0 0.0
    %1294 = vmatprep.subr.mxu0 0.0
    %1295 = vmatpush1.msra.mxu0 0.0
    %1296 = vmatprep.subr.mxu0 0.0
    %1297 = vmatpush1.msra.mxu0 0.0
    %1298 = vmatprep.subr.mxu0 0.0
    %1299 = vmatpush1.msra.mxu0 0.0
    %1300 = vmatprep.subr.mxu0 0.0
    %1301 = vmatpush1.msra.mxu0 0.0
    %1302 = vmatprep.subr.mxu0 0.0
    %1303 = vmatpush1.msra.mxu0 0.0
    %1304 = vmatprep.subr.mxu0 0.0
    %1305 = vmatpush1.msra.mxu0 0.0
    %1306 = vmatprep.subr.mxu0 0.0
    %1307 = vmatpush1.msra.mxu0 0.0
    %1308 = vmatprep.subr.mxu0 0.0
    %1309 = vmatpush1.msra.mxu0 0.0
    %1310 = vmatprep.mubr.f32.mxu0 0.0
    %1311 = vmatmul.mubr.f32.gmra.mrb[0].mxu0 %v1244
    %v1312 = vpop.f32.mrb[0].mxu0
    %v1313 = vadd.f32 %v1242, %v1312
    %v1314 = vpop.f32.mrb[0].mxu0
    %1315 = vdwg.mxu0
    %v1317 = vsel %vm82, %v1313, 0
    %v1320 = vsel %vm82, %v1129, 0
    %v1323 = vsel %vm82, %v1134, 0
    %v1326 = vsel %vm82, %v1139, 0
    %v1329 = vsel %vm82, %v1144, 0
    %v1332 = vsel %vm82, %v1149, 0
    %v1335 = vsel %vm82, %v1154, 0
    %v1338 = vsel %vm82, %v1159, 0
    %v1341 = vsel %vm82, %v1164, 0
    %v1344 = vsel %vm82, %v1169, 0
    %v1347 = vsel %vm82, %v1174, 0
    %v1350 = vsel %vm82, %v1179, 0
    %v1353 = vsel %vm82, %v1184, 0
    %v1356 = vsel %vm82, %v1189, 0
    %v1359 = vsel %vm82, %v1194, 0
    %v1362 = vsel %vm82, %v1199, 0
    %v1365 = vsel %vm82, %v1204, 0
    %1367 = vmatprep.subr.mxu0 0.0
    %1368 = vmatpush1.xpose.msra.mxu0 %v1320
    %1369 = vmatprep.subr.mxu0 0.0
    %1370 = vmatpush1.xpose.msra.mxu0 %v1323
    %1371 = vmatprep.subr.mxu0 0.0
    %1372 = vmatpush1.xpose.msra.mxu0 %v1326
    %1373 = vmatprep.subr.mxu0 0.0
    %1374 = vmatpush1.xpose.msra.mxu0 %v1329
    %1375 = vmatprep.subr.mxu0 0.0
    %1376 = vmatpush1.xpose.msra.mxu0 %v1332
    %1377 = vmatprep.subr.mxu0 0.0
    %1378 = vmatpush1.xpose.msra.mxu0 %v1335
    %1379 = vmatprep.subr.mxu0 0.0
    %1380 = vmatpush1.xpose.msra.mxu0 %v1338
    %1381 = vmatprep.subr.mxu0 0.0
    %1382 = vmatpush1.xpose.msra.mxu0 %v1341
    %1383 = vmatprep.subr.mxu0 0.0
    %1384 = vmatpush1.xpose.msra.mxu0 %v1344
    %1385 = vmatprep.subr.mxu0 0.0
    %1386 = vmatpush1.xpose.msra.mxu0 %v1347
    %1387 = vmatprep.subr.mxu0 0.0
    %1388 = vmatpush1.xpose.msra.mxu0 %v1350
    %1389 = vmatprep.subr.mxu0 0.0
    %1390 = vmatpush1.xpose.msra.mxu0 %v1353
    %1391 = vmatprep.subr.mxu0 0.0
    %1392 = vmatpush1.xpose.msra.mxu0 %v1356
    %1393 = vmatprep.subr.mxu0 0.0
    %1394 = vmatpush1.xpose.msra.mxu0 %v1359
    %1395 = vmatprep.subr.mxu0 0.0
    %1396 = vmatpush1.xpose.msra.mxu0 %v1362
    %1397 = vmatprep.subr.mxu0 0.0
    %1398 = vmatpush1.xpose.msra.mxu0 %v1365
    %1399 = vmatprep.subr.mxu0 0.0
    %1400 = vmatpush1.xpose.msra.mxu0 0.0
    %1401 = vmatprep.subr.mxu0 0.0
    %1402 = vmatpush1.xpose.msra.mxu0 0.0
    %1403 = vmatprep.subr.mxu0 0.0
    %1404 = vmatpush1.xpose.msra.mxu0 0.0
    %1405 = vmatprep.subr.mxu0 0.0
    %1406 = vmatpush1.xpose.msra.mxu0 0.0
    %1407 = vmatprep.subr.mxu0 0.0
    %1408 = vmatpush1.xpose.msra.mxu0 0.0
    %1409 = vmatprep.subr.mxu0 0.0
    %1410 = vmatpush1.xpose.msra.mxu0 0.0
    %1411 = vmatprep.subr.mxu0 0.0
    %1412 = vmatpush1.xpose.msra.mxu0 0.0
    %1413 = vmatprep.subr.mxu0 0.0
    %1414 = vmatpush1.xpose.msra.mxu0 0.0
    %1415 = vmatprep.subr.mxu0 0.0
    %1416 = vmatpush1.xpose.msra.mxu0 0.0
    %1417 = vmatprep.subr.mxu0 0.0
    %1418 = vmatpush1.xpose.msra.mxu0 0.0
    %1419 = vmatprep.subr.mxu0 0.0
    %1420 = vmatpush1.xpose.msra.mxu0 0.0
    %1421 = vmatprep.subr.mxu0 0.0
    %1422 = vmatpush1.xpose.msra.mxu0 0.0
    %1423 = vmatprep.subr.mxu0 0.0
    %1424 = vmatpush1.xpose.msra.mxu0 0.0
    %1425 = vmatprep.subr.mxu0 0.0
    %1426 = vmatpush1.xpose.msra.mxu0 0.0
    %1427 = vmatprep.subr.mxu0 0.0
    %1428 = vmatpush1.xpose.msra.mxu0 0.0
    %1429 = vmatprep.subr.mxu0 0.0
    %1430 = vmatpush1.xpose.msra.mxu0 0.0
    %1431 = vmatprep.mubr.f32.mxu0 0.0
    %1432 = vmatmul.mubr.f32.gmra.mrb[0].mxu0 %v1317
    %v1433 = vpop.f32.mrb[0].mxu0
    %v1434 = vadd.f32 0.0, %v1433
    %v1435 = vpop.f32.mrb[0].mxu0
    %1436 = vdwg.mxu0
    %v1437 = vmul.f32 %v1434, 0.17677669
    %v1438 = vrot.slane %v1437, 4
    %v1439 = vmax.f32 %v1437, %v1438
    %v1440 = vrot.slane %v1439, 2
    %v1441 = vmax.f32 %v1439, %v1440
    %v1442 = vrot.slane %v1441, 1
    %v1443 = vmax.f32 %v1441, %v1442
    %v1444 = vsub.f32 %v1437, %v1443
    %v1445 = vmul.f32 %v1444, 1.442695
    %v1446 = vpow.pop %v1445
    %v1447 = vrot.slane %v1446, 4
    %v1448 = vadd.f32 %v1446, %v1447
    %v1449 = vrot.slane %v1448, 2
    %v1450 = vadd.f32 %v1448, %v1449
    %v1451 = vrot.slane %v1450, 1
    %v1452 = vadd.f32 %v1450, %v1451
    %v1453 = vrcp.pop %v1452
    %v1454 = vmul.f32 %v1446, %v1453
    %v1455 = vadd.f32 %v1454, 1e-08
    %1456 = vst [vmem:[#allocation4] sm:$0xff] %v1455
    %vm1457 = vcmask 523264
    %v1458 = vsel %vm1457, %v1455, 0.0
    %1459 = vadd.xlane.f32.xlu0 %v1458
    %v1460 = vpop.xlane.xlu0 %1459
    %v1461 = vrcp.pop %v1460
    %v1462 = vmul.f32 %v1455, %v1461
    %1463 = vrot.lane.b32.xlu0 %v1129, 96
    %v1464 = vpop.permute.xlu0 %1463
    %1465 = vrot.lane.b32.xlu0 %v1134, 96
    %v1466 = vpop.permute.xlu0 %1465
    %1467 = vrot.lane.b32.xlu0 %v1139, 96
    %v1468 = vpop.permute.xlu0 %1467
    %1469 = vrot.lane.b32.xlu0 %v1144, 96
    %v1470 = vpop.permute.xlu0 %1469
    %1471 = vrot.lane.b32.xlu0 %v1149, 96
    %v1472 = vpop.permute.xlu0 %1471
    %1473 = vrot.lane.b32.xlu0 %v1154, 96
    %v1474 = vpop.permute.xlu0 %1473
    %1475 = vrot.lane.b32.xlu0 %v1159, 96
    %v1476 = vpop.permute.xlu0 %1475
    %1477 = vrot.lane.b32.xlu0 %v1164, 96
    %v1478 = vpop.permute.xlu0 %1477
    %v1488 = vsel %vm1457, %v1462, 0
    %1490 = vmatprep.subr.mxu0 0.0
    %1491 = vmatpush1.msra.mxu0 %v1464
    %1492 = vmatprep.subr.mxu0 0.0
    %1493 = vmatpush1.msra.mxu0 %v1466
    %1494 = vmatprep.subr.mxu0 0.0
    %1495 = vmatpush1.msra.mxu0 %v1468
    %1496 = vmatprep.subr.mxu0 0.0
    %1497 = vmatpush1.msra.mxu0 %v1470
    %1498 = vmatprep.subr.mxu0 0.0
    %1499 = vmatpush1.msra.mxu0 %v1472
    %1500 = vmatprep.subr.mxu0 0.0
    %1501 = vmatpush1.msra.mxu0 %v1474
    %1502 = vmatprep.subr.mxu0 0.0
    %1503 = vmatpush1.msra.mxu0 %v1476
    %1504 = vmatprep.subr.mxu0 0.0
    %1505 = vmatpush1.msra.mxu0 %v1478
    %1506 = vmatprep.subr.mxu0 0.0
    %1507 = vmatpush1.msra.mxu0 0.0
    %1508 = vmatprep.subr.mxu0 0.0
    %1509 = vmatpush1.msra.mxu0 0.0
    %1510 = vmatprep.subr.mxu0 0.0
    %1511 = vmatpush1.msra.mxu0 0.0
    %1512 = vmatprep.subr.mxu0 0.0
    %1513 = vmatpush1.msra.mxu0 0.0
    %1514 = vmatprep.subr.mxu0 0.0
    %1515 = vmatpush1.msra.mxu0 0.0
    %1516 = vmatprep.subr.mxu0 0.0
    %1517 = vmatpush1.msra.mxu0 0.0
    %1518 = vmatprep.subr.mxu0 0.0
    %1519 = vmatpush1.msra.mxu0 0.0
    %1520 = vmatprep.subr.mxu0 0.0
    %1521 = vmatpush1.msra.mxu0 0.0
    %1522 = vmatprep.subr.mxu0 0.0
    %1523 = vmatpush1.msra.mxu0 0.0
    %1524 = vmatprep.subr.mxu0 0.0
    %1525 = vmatpush1.msra.mxu0 0.0
    %1526 = vmatprep.subr.mxu0 0.0
    %1527 = vmatpush1.msra.mxu0 0.0
    %1528 = vmatprep.subr.mxu0 0.0
    %1529 = vmatpush1.msra.mxu0 0.0
    %1530 = vmatprep.subr.mxu0 0.0
    %1531 = vmatpush1.msra.mxu0 0.0
    %1532 = vmatprep.subr.mxu0 0.0
    %1533 = vmatpush1.msra.mxu0 0.0
    %1534 = vmatprep.subr.mxu0 0.0
    %1535 = vmatpush1.msra.mxu0 0.0
    %1536 = vmatprep.subr.mxu0 0.0
    %1537 = vmatpush1.msra.mxu0 0.0
    %1538 = vmatprep.subr.mxu0 0.0
    %1539 = vmatpush1.msra.mxu0 0.0
    %1540 = vmatprep.subr.mxu0 0.0
    %1541 = vmatpush1.msra.mxu0 0.0
    %1542 = vmatprep.subr.mxu0 0.0
    %1543 = vmatpush1.msra.mxu0 0.0
    %1544 = vmatprep.subr.mxu0 0.0
    %1545 = vmatpush1.msra.mxu0 0.0
    %1546 = vmatprep.subr.mxu0 0.0
    %1547 = vmatpush1.msra.mxu0 0.0
    %1548 = vmatprep.subr.mxu0 0.0
    %1549 = vmatpush1.msra.mxu0 0.0
    %1550 = vmatprep.subr.mxu0 0.0
    %1551 = vmatpush1.msra.mxu0 0.0
    %1552 = vmatprep.subr.mxu0 0.0
    %1553 = vmatpush1.msra.mxu0 0.0
    %1554 = vmatprep.mubr.f32.mxu0 0.0
    %1555 = vmatmul.mubr.f32.gmra.mrb[0].mxu0 %v1488
    %v1556 = vpop.f32.mrb[0].mxu0
    %v1557 = vadd.f32 0.0, %v1556
    %v1558 = vpop.f32.mrb[0].mxu0
    %1559 = vdwg.mxu0
    %1561 = vrot.lane.b32.xlu0 %v1455, 64
    %v1562 = vpop.permute.xlu0 %1561
    %v1564 = vsel %vm1457, %v1562, 0.0
    %1565 = vadd.xlane.f32.xlu0 %v1564
    %v1566 = vpop.xlane.xlu0 %1565
    %v1567 = vrcp.pop %v1566
    %v1568 = vmul.f32 %v1455, %v1567
    %1570 = vrot.lane.b32.xlu0 %v1568, 64
    %v1571 = vpop.permute.xlu0 %1570
    %1572 = vrot.lane.b32.xlu0 %v1169, 96
    %v1573 = vpop.permute.xlu0 %1572
    %1574 = vrot.lane.b32.xlu0 %v1174, 96
    %v1575 = vpop.permute.xlu0 %1574
    %1576 = vrot.lane.b32.xlu0 %v1179, 96
    %v1577 = vpop.permute.xlu0 %1576
    %1578 = vrot.lane.b32.xlu0 %v1184, 96
    %v1579 = vpop.permute.xlu0 %1578
    %1580 = vrot.lane.b32.xlu0 %v1189, 96
    %v1581 = vpop.permute.xlu0 %1580
    %1582 = vrot.lane.b32.xlu0 %v1194, 96
    %v1583 = vpop.permute.xlu0 %1582
    %1584 = vrot.lane.b32.xlu0 %v1199, 96
    %v1585 = vpop.permute.xlu0 %1584
    %1586 = vrot.lane.b32.xlu0 %v1204, 96
    %v1587 = vpop.permute.xlu0 %1586
    %v1596 = vsel %vm1457, %v1571, 0
    %1598 = vmatprep.subr.mxu0 0.0
    %1599 = vmatpush1.msra.mxu0 %v1573
    %1600 = vmatprep.subr.mxu0 0.0
    %1601 = vmatpush1.msra.mxu0 %v1575
    %1602 = vmatprep.subr.mxu0 0.0
    %1603 = vmatpush1.msra.mxu0 %v1577
    %1604 = vmatprep.subr.mxu0 0.0
    %1605 = vmatpush1.msra.mxu0 %v1579
    %1606 = vmatprep.subr.mxu0 0.0
    %1607 = vmatpush1.msra.mxu0 %v1581
    %1608 = vmatprep.subr.mxu0 0.0
    %1609 = vmatpush1.msra.mxu0 %v1583
    %1610 = vmatprep.subr.mxu0 0.0
    %1611 = vmatpush1.msra.mxu0 %v1585
    %1612 = vmatprep.subr.mxu0 0.0
    %1613 = vmatpush1.msra.mxu0 %v1587
    %1614 = vmatprep.subr.mxu0 0.0
    %1615 = vmatpush1.msra.mxu0 0.0
    %1616 = vmatprep.subr.mxu0 0.0
    %1617 = vmatpush1.msra.mxu0 0.0
    %1618 = vmatprep.subr.mxu0 0.0
    %1619 = vmatpush1.msra.mxu0 0.0
    %1620 = vmatprep.subr.mxu0 0.0
    %1621 = vmatpush1.msra.mxu0 0.0
    %1622 = vmatprep.subr.mxu0 0.0
    %1623 = vmatpush1.msra.mxu0 0.0
    %1624 = vmatprep.subr.mxu0 0.0
    %1625 = vmatpush1.msra.mxu0 0.0
    %1626 = vmatprep.subr.mxu0 0.0
    %1627 = vmatpush1.msra.mxu0 0.0
    %1628 = vmatprep.subr.mxu0 0.0
    %1629 = vmatpush1.msra.mxu0 0.0
    %1630 = vmatprep.subr.mxu0 0.0
    %1631 = vmatpush1.msra.mxu0 0.0
    %1632 = vmatprep.subr.mxu0 0.0
    %1633 = vmatpush1.msra.mxu0 0.0
    %1634 = vmatprep.subr.mxu0 0.0
    %1635 = vmatpush1.msra.mxu0 0.0
    %1636 = vmatprep.subr.mxu0 0.0
    %1637 = vmatpush1.msra.mxu0 0.0
    %1638 = vmatprep.subr.mxu0 0.0
    %1639 = vmatpush1.msra.mxu0 0.0
    %1640 = vmatprep.subr.mxu0 0.0
    %1641 = vmatpush1.msra.mxu0 0.0
    %1642 = vmatprep.subr.mxu0 0.0
    %1643 = vmatpush1.msra.mxu0 0.0
    %1644 = vmatprep.subr.mxu0 0.0
    %1645 = vmatpush1.msra.mxu0 0.0
    %1646 = vmatprep.subr.mxu0 0.0
    %1647 = vmatpush1.msra.mxu0 0.0
    %1648 = vmatprep.subr.mxu0 0.0
    %1649 = vmatpush1.msra.mxu0 0.0
    %1650 = vmatprep.subr.mxu0 0.0
    %1651 = vmatpush1.msra.mxu0 0.0
    %1652 = vmatprep.subr.mxu0 0.0
    %1653 = vmatpush1.msra.mxu0 0.0
    %1654 = vmatprep.subr.mxu0 0.0
    %1655 = vmatpush1.msra.mxu0 0.0
    %1656 = vmatprep.subr.mxu0 0.0
    %1657 = vmatpush1.msra.mxu0 0.0
    %1658 = vmatprep.subr.mxu0 0.0
    %1659 = vmatpush1.msra.mxu0 0.0
    %1660 = vmatprep.subr.mxu0 0.0
    %1661 = vmatpush1.msra.mxu0 0.0
    %1662 = vmatprep.mubr.f32.mxu0 0.0
    %1663 = vmatmul.mubr.f32.gmra.mrb[0].mxu0 %v1596
    %v1664 = vpop.f32.mrb[0].mxu0
    %v1665 = vadd.f32 0.0, %v1664
    %v1666 = vpop.f32.mrb[0].mxu0
    %1667 = vdwg.mxu0
    %v1669 = vrot.slane %v1665, 4
    %vm1671 = vcmask 1043456
    %v1672 = vsel %vm1671, %v1557, %v1669
    %s1673 = scalar_lea.vmem %s7, 6
    %v1674 = vld [vmem:[%s1673] sm:$0x3]
    %v1675 = vsel %vm82, %v1672, 0.0
    %1676 = vadd.xlane.f32.xlu0 %v1675
    %v1677 = vpop.xlane.xlu0 %1676
    %v1678 = vmul.f32 %v1677, %v131
    %v1679 = vsub.f32 %v1672, %v1678
    %v1680 = vmul.f32 %v1679, %v1679
    %v1681 = vsel %vm82, %v1680, 0.0
    %1682 = vadd.xlane.f32.xlu0 %v1681
    %v1683 = vpop.xlane.xlu0 %1682
    %v1684 = vmul.f32 %v1683, %v131
    %v1685 = vadd.f32 %v1684, 1e-05
    %v1686 = vrsqrt.pop %v1685
    %v1687 = vmul.f32 %v1679, %v1686
    %v1688 = vlaneseq
    %v1689 = vshrl.u32 %v1688, 7
    %v1690 = vsub.s32 0, %v1689
    %v1691 = vrot.slane %v1674, %v1690
    %v1692 = vmul.f32 %v1687, %v1691
    %v1693 = vlaneseq
    %v1694 = vshrl.u32 %v1693, 7
    %v1695 = vsub.s32 1, %v1694
    %v1696 = vrot.slane %v1674, %v1695
    %v1697 = vadd.f32 %v1692, %v1696
    %s1698 = scalar_lea.vmem %s3, 96
    %v1699 = vld [vmem:[%s1698] sm:$0xff]
    %v1700 = vld [vmem:[%s1698 + $0x8] sm:$0xff]
    %v1701 = vld [vmem:[%s1698 + $0x10] sm:$0xff]
    %v1702 = vld [vmem:[%s1698 + $0x18] sm:$0xff]
    %v1703 = vld [vmem:[%s4 + $0x3] sm:$0x1]
    %v1704 = vlaneseq
    %v1705 = vshrl.u32 %v1704, 7
    %v1706 = vsub.s32 0, %v1705
    %v1707 = vrot.slane %v1703, %v1706
    %v1709 = vsel %vm82, %v1697, 0
    %1711 = vmatprep.subr.mxu0 0.0
    %1712 = vmatpush1.msra.mxu0 %v1699
    %1713 = vmatprep.subr.mxu0 0.0
    %1714 = vmatpush1.msra.mxu0 %v1700
    %1715 = vmatprep.subr.mxu0 0.0
    %1716 = vmatpush1.msra.mxu0 %v1701
    %1717 = vmatprep.subr.mxu0 0.0
    %1718 = vmatpush1.msra.mxu0 %v1702
    %1719 = vmatprep.subr.mxu0 0.0
    %1720 = vmatpush1.msra.mxu0 0.0
    %1721 = vmatprep.subr.mxu0 0.0
    %1722 = vmatpush1.msra.mxu0 0.0
    %1723 = vmatprep.subr.mxu0 0.0
    %1724 = vmatpush1.msra.mxu0 0.0
    %1725 = vmatprep.subr.mxu0 0.0
    %1726 = vmatpush1.msra.mxu0 0.0
    %1727 = vmatprep.subr.mxu0 0.0
    %1728 = vmatpush1.msra.mxu0 0.0
    %1729 = vmatprep.subr.mxu0 0.0
    %1730 = vmatpush1.msra.mxu0 0.0
    %1731 = vmatprep.subr.mxu0 0.0
    %1732 = vmatpush1.msra.mxu0 0.0
    %1733 = vmatprep.subr.mxu0 0.0
    %1734 = vmatpush1.msra.mxu0 0.0
    %1735 = vmatprep.subr.mxu0 0.0
    %1736 = vmatpush1.msra.mxu0 0.0
    %1737 = vmatprep.subr.mxu0 0.0
    %1738 = vmatpush1.msra.mxu0 0.0
    %1739 = vmatprep.subr.mxu0 0.0
    %1740 = vmatpush1.msra.mxu0 0.0
    %1741 = vmatprep.subr.mxu0 0.0
    %1742 = vmatpush1.msra.mxu0 0.0
    %1743 = vmatprep.subr.mxu0 0.0
    %1744 = vmatpush1.msra.mxu0 0.0
    %1745 = vmatprep.subr.mxu0 0.0
    %1746 = vmatpush1.msra.mxu0 0.0
    %1747 = vmatprep.subr.mxu0 0.0
    %1748 = vmatpush1.msra.mxu0 0.0
    %1749 = vmatprep.subr.mxu0 0.0
    %1750 = vmatpush1.msra.mxu0 0.0
    %1751 = vmatprep.subr.mxu0 0.0
    %1752 = vmatpush1.msra.mxu0 0.0
    %1753 = vmatprep.subr.mxu0 0.0
    %1754 = vmatpush1.msra.mxu0 0.0
    %1755 = vmatprep.subr.mxu0 0.0
    %1756 = vmatpush1.msra.mxu0 0.0
    %1757 = vmatprep.subr.mxu0 0.0
    %1758 = vmatpush1.msra.mxu0 0.0
    %1759 = vmatprep.subr.mxu0 0.0
    %1760 = vmatpush1.msra.mxu0 0.0
    %1761 = vmatprep.subr.mxu0 0.0
    %1762 = vmatpush1.msra.mxu0 0.0
    %1763 = vmatprep.subr.mxu0 0.0
    %1764 = vmatpush1.msra.mxu0 0.0
    %1765 = vmatprep.subr.mxu0 0.0
    %1766 = vmatpush1.msra.mxu0 0.0
    %1767 = vmatprep.subr.mxu0 0.0
    %1768 = vmatpush1.msra.mxu0 0.0
    %1769 = vmatprep.subr.mxu0 0.0
    %1770 = vmatpush1.msra.mxu0 0.0
    %1771 = vmatprep.subr.mxu0 0.0
    %1772 = vmatpush1.msra.mxu0 0.0
    %1773 = vmatprep.subr.mxu0 0.0
    %1774 = vmatpush1.msra.mxu0 0.0
    %1775 = vmatprep.mubr.f32.mxu0 0.0
    %1776 = vmatmul.mubr.f32.gmra.mrb[0].mxu0 %v1709
    %v1777 = vpop.f32.mrb[0].mxu0
    %v1778 = vadd.f32 %v1707, %v1777
    %v1779 = vpop.f32.mrb[0].mxu0
    %1780 = vdwg.mxu0
    %v1781 = vmax.f32 %v1778, 0.0
    %s1782 = scalar_lea.vmem %s3, 128
    %v1783 = vld [vmem:[%s1782] sm:$0xff]
    %v1784 = vld [vmem:[%s1782 + $0x8] sm:$0xff]
    %v1785 = vld [vmem:[%s1782 + $0x10] sm:$0xff]
    %v1786 = vld [vmem:[%s1782 + $0x18] sm:$0xff]
    %v1787 = vld [vmem:[%s4 + $0x4] sm:$0x1]
    %v1788 = vlaneseq
    %v1789 = vshrl.u32 %v1788, 7
    %v1790 = vsub.s32 0, %v1789
    %v1791 = vrot.slane %v1787, %v1790
    %v1793 = vsel %vm82, %v1781, 0
    %1795 = vmatprep.subr.mxu0 0.0
    %1796 = vmatpush1.msra.mxu0 %v1783
    %1797 = vmatprep.subr.mxu0 0.0
    %1798 = vmatpush1.msra.mxu0 %v1784
    %1799 = vmatprep.subr.mxu0 0.0
    %1800 = vmatpush1.msra.mxu0 %v1785
    %1801 = vmatprep.subr.mxu0 0.0
    %1802 = vmatpush1.msra.mxu0 %v1786
    %1803 = vmatprep.subr.mxu0 0.0
    %1804 = vmatpush1.msra.mxu0 0.0
    %1805 = vmatprep.subr.mxu0 0.0
    %1806 = vmatpush1.msra.mxu0 0.0
    %1807 = vmatprep.subr.mxu0 0.0
    %1808 = vmatpush1.msra.mxu0 0.0
    %1809 = vmatprep.subr.mxu0 0.0
    %1810 = vmatpush1.msra.mxu0 0.0
    %1811 = vmatprep.subr.mxu0 0.0
    %1812 = vmatpush1.msra.mxu0 0.0
    %1813 = vmatprep.subr.mxu0 0.0
    %1814 = vmatpush1.msra.mxu0 0.0
    %1815 = vmatprep.subr.mxu0 0.0
    %1816 = vmatpush1.msra.mxu0 0.0
    %1817 = vmatprep.subr.mxu0 0.0
    %1818 = vmatpush1.msra.mxu0 0.0
    %1819 = vmatprep.subr.mxu0 0.0
    %1820 = vmatpush1.msra.mxu0 0.0
    %1821 = vmatprep.subr.mxu0 0.0
    %1822 = vmatpush1.msra.mxu0 0.0
    %1823 = vmatprep.subr.mxu0 0.0
    %1824 = vmatpush1.msra.mxu0 0.0
    %1825 = vmatprep.subr.mxu0 0.0
    %1826 = vmatpush1.msra.mxu0 0.0
    %1827 = vmatprep.subr.mxu0 0.0
    %1828 = vmatpush1.msra.mxu0 0.0
    %1829 = vmatprep.subr.mxu0 0.0
    %1830 = vmatpush1.msra.mxu0 0.0
    %1831 = vmatprep.subr.mxu0 0.0
    %1832 = vmatpush1.msra.mxu0 0.0
    %1833 = vmatprep.subr.mxu0 0.0
    %1834 = vmatpush1.msra.mxu0 0.0
    %1835 = vmatprep.subr.mxu0 0.0
    %1836 = vmatpush1.msra.mxu0 0.0
    %1837 = vmatprep.subr.mxu0 0.0
    %1838 = vmatpush1.msra.mxu0 0.0
    %1839 = vmatprep.subr.mxu0 0.0
    %1840 = vmatpush1.msra.mxu0 0.0
    %1841 = vmatprep.subr.mxu0 0.0
    %1842 = vmatpush1.msra.mxu0 0.0
    %1843 = vmatprep.subr.mxu0 0.0
    %1844 = vmatpush1.msra.mxu0 0.0
    %1845 = vmatprep.subr.mxu0 0.0
    %1846 = vmatpush1.msra.mxu0 0.0
    %1847 = vmatprep.subr.mxu0 0.0
    %1848 = vmatpush1.msra.mxu0 0.0
    %1849 = vmatprep.subr.mxu0 0.0
    %1850 = vmatpush1.msra.mxu0 0.0
    %1851 = vmatprep.subr.mxu0 0.0
    %1852 = vmatpush1.msra.mxu0 0.0
    %1853 = vmatprep.subr.mxu0 0.0
    %1854 = vmatpush1.msra.mxu0 0.0
    %1855 = vmatprep.subr.mxu0 0.0
    %1856 = vmatpush1.msra.mxu0 0.0
    %1857 = vmatprep.subr.mxu0 0.0
    %1858 = vmatpush1.msra.mxu0 0.0
    %1859 = vmatprep.mubr.f32.mxu0 0.0
    %1860 = vmatmul.mubr.f32.gmra.mrb[0].mxu0 %v1793
    %v1861 = vpop.f32.mrb[0].mxu0
    %v1862 = vadd.f32 %v1791, %v1861
    %v1863 = vpop.f32.mrb[0].mxu0
    %1864 = vdwg.mxu0
    %v1865 = vadd.f32 %v1672, %v1862
    %1866 = vst.msk [vmem:[#allocation2] sm:$0xff] %vm82, %v1865
    // Predicated region
    $region34: #{tpu_custom_call.1} parent=1 // pred_check
      _
    $region35: #{tpu_custom_call.1} parent=1 // pred_check_branch
      %1868 = sbr.rel (0) target = $region37
    $region36: #{tpu_custom_call.1} parent=1 // pred_region
      %s1870 = ssub.s32 128, 128
      %1871 = vsyncadd [#allocation3], %s1870
      %s1873 = sshll.u32 [#allocation2], 4
      %s1874 = int_to_ptr.vmem [resolvable:$true] %s1873
      %1876 = dma.vmem_to_hbm [thread:$0]  %s1874, 128, %s8, [#allocation3]
    $region37: #{tpu_custom_call.1} parent=1 // pred_fallthru
      _
    // Predicated region
    $region38: #{tpu_custom_call.1} parent=1 // pred_check
      _
    $region39: #{tpu_custom_call.1} parent=1 // pred_check_branch
      %1878 = sbr.rel (0) target = $region41
    $region40: #{tpu_custom_call.1} parent=1 // pred_region
      %s1880 = ssub.s32 128, 128
      %1881 = vsyncadd [#allocation5], %s1880
      %s1883 = sshll.u32 [#allocation4], 4
      %s1884 = int_to_ptr.vmem [resolvable:$true] %s1883
      %1886 = dma.vmem_to_hbm [thread:$0]  %s1884, 128, %s9, [#allocation5]
    $region41: #{tpu_custom_call.1} parent=1 // pred_fallthru
      _
    // Predicated region
    $region42: #{tpu_custom_call.1} parent=1 // pred_check
      _
    $region43: #{tpu_custom_call.1} parent=1 // pred_check_branch
      %1888 = sbr.rel (0) target = $region45
    $region44: #{tpu_custom_call.1} parent=1 // pred_region
      %1889 = dma.done [#allocation3], 128
    $region45: #{tpu_custom_call.1} parent=1 // pred_fallthru
      _
    // Predicated region
    $region46: #{tpu_custom_call.1} parent=1 // pred_check
      _
    $region47: #{tpu_custom_call.1} parent=1 // pred_check_branch
      %1891 = sbr.rel (0) target = $region49
    $region48: #{tpu_custom_call.1} parent=1 // pred_region
      %1892 = dma.done [#allocation5], 128
    $region49: #{tpu_custom_call.1} parent=1 // pred_fallthru
      _
    %1893 = vsyncpa [#allocation3], 1
    %1894 = vsyncpa [#allocation5], 1

</llo_original>
